<compile_context>
chip_gen: v6e
topology: v6e:2x2x1
jax: 0.10.0
libtpu: 0.0.40
codegen_flags: <defaults>
</compile_context>

<pallas_src>
import jax
import jax.numpy as jnp
from jax.experimental import pallas as pl
from jax.experimental.pallas import tpu as pltpu


def skip_upsample_kernel(x_ref, y_ref, r_ref, u_ref, w_ref, b_ref, o_ref,
                         z_ref, t_ref):
    # x_ref: (1, Cin, H, W)           VMEM  low-res input (NCHW)
    # y_ref: (1, cblk, 2*hblk, 2W)    VMEM  skip connection, this step's tile
    # r_ref: (2*hblk, H)              VMEM  row-interpolation rows for this tile
    # u_ref: (W, 2W)                  VMEM  column-interpolation matrix
    # w_ref: (Cout*Cin,)              SMEM  1x1 conv weight (flattened)
    # b_ref: (Cout,)                  SMEM  1x1 conv bias
    # o_ref: (1, cblk, 2*hblk, 2W)    VMEM  output tile (NCHW, interleaved)
    # z_ref: (cblk*H, W)              VMEM scratch  conv result slab (compute dtype)
    # t_ref: (cblk*H, 2W)             VMEM scratch  z @ U slab       (compute dtype)
    cin = x_ref.shape[1]
    cb = o_ref.shape[1]
    H = x_ref.shape[2]
    c0 = pl.program_id(1) * cb                     # first output channel of block

    # Full-height 1x1 conv + column (lane-axis) upsample pass: once per (n, cb).
    @pl.when(pl.program_id(2) == 0)
    def _():
        xs = [x_ref[0, k] for k in range(cin)]     # hoisted channel loads, (H, W)
        for cl in range(cb):
            c = c0 + cl
            # 1x1 conv as VPU scalar*array FMAs (weights/bias are SMEM scalars).
            z = w_ref[c * cin] * xs[0]
            for k in range(1, cin):
                z = z + w_ref[c * cin + k] * xs[k]
            z = z + b_ref[c]                       # bias commutes with the upsample
            z_ref[pl.ds(cl * H, H), :] = z.astype(z_ref.dtype)
        # Batched column pass across the channel block: one (cb*H, W) @ (W, 2W)
        # MXU matmul, bf16 operands, f32 accumulation.
        t_ref[...] = jnp.dot(z_ref[...], u_ref[...],
                             preferred_element_type=jnp.float32).astype(t_ref.dtype)

    # Row (sublane-axis) upsample for this row tile + skip add + contiguous store.
    r_blk = r_ref[...]                             # (2*hblk, H)
    for cl in range(cb):
        t_c = t_ref[pl.ds(cl * H, H), :]           # (H, 2W)
        up = jnp.dot(r_blk, t_c, preferred_element_type=jnp.float32)  # (2*hblk, 2W)
        o_ref[0, cl] = (up + y_ref[0, cl].astype(jnp.float32)).astype(o_ref.dtype)


def _up_matrix(n, dtype):
    """(2n, n) matrix M such that M @ v is the bilinear x2 upsample of v
    (scale_factor=2, align_corners=False, edge-clamped).  Weights are
    {0.25, 0.75, 1.0}: exact in bf16."""
    o = jnp.arange(2 * n, dtype=jnp.float32)
    src = (o + 0.5) / 2.0 - 0.5
    i0 = jnp.floor(src)
    frac = src - i0
    lo = jnp.clip(i0.astype(jnp.int32), 0, n - 1)
    hi = jnp.clip(i0.astype(jnp.int32) + 1, 0, n - 1)
    m = (jax.nn.one_hot(lo, n, dtype=jnp.float32) * (1.0 - frac)[:, None]
         + jax.nn.one_hot(hi, n, dtype=jnp.float32) * frac[:, None])
    return m.astype(dtype)


_VMEM_BUDGET = 36 * 1024 * 1024   # per-step target; safe under v7x's 64 MiB VMEM


def _est_vmem_bytes(Cin, H, W, cblk, hblk, x_bytes, y_bytes, o_bytes, c_bytes):
    """Rough per-step VMEM: double-buffered pipelined blocks + scratch + temps."""
    x_blk = Cin * H * W * x_bytes
    y_blk = cblk * (2 * hblk) * (2 * W) * y_bytes
    o_blk = cblk * (2 * hblk) * (2 * W) * o_bytes
    r_blk = (2 * hblk) * H * c_bytes
    u_blk = W * (2 * W) * c_bytes
    scratch = cblk * H * W * c_bytes + cblk * H * (2 * W) * c_bytes        # z + t
    temps = cblk * H * (2 * W) * 4 + (2 * hblk) * (2 * W) * 4              # f32 matmul outs
    return 2 * (x_blk + y_blk + o_blk + r_blk + u_blk) + scratch + temps


def _choose_tiling(N, Cin, Cout, H, W, x_bytes, y_bytes, o_bytes, c_bytes):
    """Largest (cblk, hblk) under the VMEM budget (fewest grid steps); the row
    axis exists so y/out blocks are bounded independently of H at production
    resolutions.  Keep >= 2 parallel blocks so v7x megacore can split work."""
    h_cands = [h for h in range(1, H + 1)
               if H % h == 0 and (h == H or (2 * h) % 8 == 0)]
    c_cands = [c for c in range(1, Cout + 1) if Cout % c == 0]
    best = None
    for cblk in c_cands:
        for hblk in h_cands:
            if _est_vmem_bytes(Cin, H, W, cblk, hblk,
                               x_bytes, y_bytes, o_bytes, c_bytes) > _VMEM_BUDGET:
                continue
            key = (cblk * hblk, hblk)          # prefer big blocks, then full height
            if best is None or key > best[0]:
                best = (key, cblk, hblk)
    if best is None:
        cblk, hblk = 1, min(h_cands)           # let vmem_limit_bytes stretch
    else:
        cblk, hblk = best[1], best[2]
    if N * (Cout // cblk) < 2:                 # v7x: 2 TCs want >= 2 parallel blocks
        for c in sorted(c_cands, reverse=True):
            if c < cblk:
                cblk = c
                break
    return cblk, hblk


def skip_upsample(x, y, w, b, *, compute_dtype=jnp.bfloat16, cblk=None, hblk=None):
    """SkipUpSample.forward: bilinear x2 upsample of x -> 1x1 conv -> + y.  All NCHW.

    x: (N, Cin, H, W), y: (N, Cout, 2H, 2W), w: (Cout, Cin), b: (Cout,).
    Output dtype follows y.dtype (pass bf16 y for bf16 skip/out HBM traffic).
    """
    N, Cin, H, W = x.shape
    Cout = w.shape[0]
    assert y.shape == (N, Cout, 2 * H, 2 * W)
    assert w.shape == (Cout, Cin) and b.shape == (Cout,)

    out_dtype = y.dtype
    c_bytes = jnp.dtype(compute_dtype).itemsize
    auto_cblk, auto_hblk = _choose_tiling(
        N, Cin, Cout, H, W, x.dtype.itemsize, y.dtype.itemsize,
        jnp.dtype(out_dtype).itemsize, c_bytes)
    cblk = auto_cblk if cblk is None else cblk
    hblk = auto_hblk if hblk is None else hblk
    assert Cout % cblk == 0 and H % hblk == 0
    assert hblk == H or (2 * hblk) % 8 == 0
    n_cb, n_rt = Cout // cblk, H // hblk

    R = _up_matrix(H, compute_dtype)             # (2H, H)  row pass
    U = _up_matrix(W, compute_dtype).T           # (W, 2W)  column pass
    w_flat = w.reshape(-1).astype(jnp.float32)   # 1-D SMEM: no (8,128) pad blow-up
    b_flat = b.reshape(-1).astype(jnp.float32)

    est = _est_vmem_bytes(Cin, H, W, cblk, hblk, x.dtype.itemsize,
                          y.dtype.itemsize, jnp.dtype(out_dtype).itemsize, c_bytes)
    vmem_limit = int(min(max(est + (8 << 20), 32 << 20), 64 << 20))

    return pl.pallas_call(
        skip_upsample_kernel,
        out_shape=jax.ShapeDtypeStruct((N, Cout, 2 * H, 2 * W), out_dtype),
        grid=(N, n_cb, n_rt),
        in_specs=[
            pl.BlockSpec((1, Cin, H, W), lambda n, cb, rt: (n, 0, 0, 0)),
            pl.BlockSpec((1, cblk, 2 * hblk, 2 * W), lambda n, cb, rt: (n, cb, rt, 0)),
            pl.BlockSpec((2 * hblk, H), lambda n, cb, rt: (rt, 0)),
            pl.BlockSpec((W, 2 * W), lambda n, cb, rt: (0, 0)),
            pl.BlockSpec(memory_space=pltpu.MemorySpace.SMEM),
            pl.BlockSpec(memory_space=pltpu.MemorySpace.SMEM),
        ],
        out_specs=pl.BlockSpec((1, cblk, 2 * hblk, 2 * W),
                               lambda n, cb, rt: (n, cb, rt, 0)),
        scratch_shapes=[
            pltpu.VMEM((cblk * H, W), compute_dtype),        # z slab (conv result)
            pltpu.VMEM((cblk * H, 2 * W), compute_dtype),    # t slab (z @ U)
        ],
        compiler_params=pltpu.CompilerParams(
            dimension_semantics=("parallel", "parallel", "arbitrary"),
            vmem_limit_bytes=vmem_limit),
    )(x, y, R, U, w_flat, b_flat)


# --------------------- pure-JAX reference (for sanity check) ---------------------
def _bilinear_up2_ref(x_nhwc):
    N, H, W, C = x_nhwc.shape

    def coords(n_in, n_out):
        src = (jnp.arange(n_out, dtype=jnp.float32) + 0.5) / 2.0 - 0.5
        i0 = jnp.floor(src)
        frac = src - i0
        i0c = jnp.clip(i0.astype(jnp.int32), 0, n_in - 1)
        i1c = jnp.clip(i0.astype(jnp.int32) + 1, 0, n_in - 1)
        return i0c, i1c, frac

    i0, i1, fh = coords(H, 2 * H)
    xr = (x_nhwc[:, i0] * (1.0 - fh)[None, :, None, None]
          + x_nhwc[:, i1] * fh[None, :, None, None])
    j0, j1, fw = coords(W, 2 * W)
    return (xr[:, :, j0] * (1.0 - fw)[None, None, :, None]
            + xr[:, :, j1] * fw[None, None, :, None])


def reference(x_nchw, y_nchw, w, b):
    # Original op order: upsample -> 1x1 conv (+bias) -> + y.
    x = jnp.transpose(x_nchw, (0, 2, 3, 1))
    y = jnp.transpose(y_nchw, (0, 2, 3, 1))
    up = _bilinear_up2_ref(x)
    out = jnp.einsum('nhwc,oc->nhwo', up, w) + b + y
    return jnp.transpose(out, (0, 3, 1, 2))


if __name__ == "__main__":
    # SkipUpSample(in_c=4, s_factor=4): x has in_c+s_factor=8 channels, y has in_c=4.
    N, in_c, s_factor, H, W = 2, 4, 4, 16, 16
    Cin, Cout = in_c + s_factor, in_c

    key = jax.random.PRNGKey(0)
    kx, ky, kw, kb = jax.random.split(key, 4)
    x = jax.random.normal(kx, (N, Cin, H, W), jnp.float32)            # NCHW
    y = jax.random.normal(ky, (N, Cout, 2 * H, 2 * W), jnp.float32)   # NCHW
    # 1x1 conv parameters (PyTorch weight (Cout, Cin, 1, 1) stored as (Cout, Cin)).
    w = jax.random.normal(kw, (Cout, Cin), jnp.float32) * 0.1
    b = jax.random.normal(kb, (Cout,), jnp.float32) * 0.1

    ref = reference(x, y, w, b)

    # Exact f32 compute path.
    out_f32 = jax.block_until_ready(skip_upsample(x, y, w, b,
                                                  compute_dtype=jnp.float32))
    assert out_f32.shape == (N, Cout, 2 * H, 2 * W)
    err = float(jnp.max(jnp.abs(out_f32 - ref)))
    assert jnp.allclose(out_f32, ref, atol=1e-4, rtol=1e-4), err

    # Default bf16-MXU compute path (f32 accumulation; relaxed tolerance).
    out_bf16 = jax.block_until_ready(skip_upsample(x, y, w, b))
    err = float(jnp.max(jnp.abs(out_bf16 - ref)))
    assert jnp.allclose(out_bf16, ref, atol=2e-2, rtol=2e-2), err

    # Explicitly exercise the channel-block + row-tile grid path.
    out_tiled = jax.block_until_ready(skip_upsample(x, y, w, b, cblk=2, hblk=4))
    err = float(jnp.max(jnp.abs(out_tiled - ref)))
    assert jnp.allclose(out_tiled, ref, atol=2e-2, rtol=2e-2), err

    print("KERNEL_OK")
</pallas_src>

<mosaic_0001>
module attributes {stable_mosaic.version = 11 : i64} {
  func.func @skip_upsample_kernel(%arg0: i32, %arg1: i32, %arg2: i32, %arg3: memref<1x8x16x16xf32, #tpu.memory_space<vmem>>, %arg4: memref<1x4x32x32xf32, #tpu.memory_space<vmem>>, %arg5: memref<32x16xf32, #tpu.memory_space<vmem>>, %arg6: memref<16x32xf32, #tpu.memory_space<vmem>>, %arg7: memref<32xf32, #tpu.memory_space<smem>>, %arg8: memref<4xf32, #tpu.memory_space<smem>>, %arg9: memref<1x4x32x32xf32, #tpu.memory_space<vmem>>, %arg10: memref<64x16xf32, #tpu.memory_space<vmem>>, %arg11: memref<64x32xf32, #tpu.memory_space<vmem>>) attributes {dimension_semantics = [#tpu.dimension_semantics<parallel>, #tpu.dimension_semantics<parallel>, #tpu.dimension_semantics<arbitrary>], iteration_bounds = array<i64: 2, 1, 1>, scalar_prefetch = 0 : i64, scratch_operands = 2 : i64, tpu.core_type = #tpu.core_type<tc>, window_params = [{transform_indices = @transform_0, window_bounds = array<i64: 1, 8, 16, 16>}, {transform_indices = @transform_1, window_bounds = array<i64: 1, 4, 32, 32>}, {transform_indices = @transform_2, window_bounds = array<i64: 32, 16>}, {pipeline_mode = #tpu.pipeline_mode<synchronous>, transform_indices = @transform_3, window_bounds = array<i64: 16, 32>}, {transform_indices = @transform_4, window_bounds = array<i64: 32>}, {transform_indices = @transform_5, window_bounds = array<i64: 4>}, {transform_indices = @transform_6, window_bounds = array<i64: 1, 4, 32, 32>}]} {
    %c4_i32 = arith.constant 4 : i32
    %0 = arith.muli %arg1, %c4_i32 : i32
    %c0_i32 = arith.constant 0 : i32
    %1 = arith.cmpi eq, %arg2, %c0_i32 : i32
    %2 = arith.extui %1 : i1 to i32
    %c0_i32_0 = arith.constant 0 : i32
    %3 = arith.cmpi ne, %2, %c0_i32_0 : i32
    scf.if %3 {
      %c0_39 = arith.constant 0 : index
      %c0_40 = arith.constant 0 : index
      %c0_41 = arith.constant 0 : index
      %c0_42 = arith.constant 0 : index
      %37 = vector.load %arg3[%c0_39, %c0_40, %c0_41, %c0_42] : memref<1x8x16x16xf32, #tpu.memory_space<vmem>>, vector<1x1x16x16xf32>
      %38 = vector.shape_cast %37 : vector<1x1x16x16xf32> to vector<16x16xf32>
      %c0_43 = arith.constant 0 : index
      %c1_44 = arith.constant 1 : index
      %c0_45 = arith.constant 0 : index
      %c0_46 = arith.constant 0 : index
      %39 = vector.load %arg3[%c0_43, %c1_44, %c0_45, %c0_46] : memref<1x8x16x16xf32, #tpu.memory_space<vmem>>, vector<1x1x16x16xf32>
      %40 = vector.shape_cast %39 : vector<1x1x16x16xf32> to vector<16x16xf32>
      %c0_47 = arith.constant 0 : index
      %c2_48 = arith.constant 2 : index
      %c0_49 = arith.constant 0 : index
      %c0_50 = arith.constant 0 : index
      %41 = vector.load %arg3[%c0_47, %c2_48, %c0_49, %c0_50] : memref<1x8x16x16xf32, #tpu.memory_space<vmem>>, vector<1x1x16x16xf32>
      %42 = vector.shape_cast %41 : vector<1x1x16x16xf32> to vector<16x16xf32>
      %c0_51 = arith.constant 0 : index
      %c3_52 = arith.constant 3 : index
      %c0_53 = arith.constant 0 : index
      %c0_54 = arith.constant 0 : index
      %43 = vector.load %arg3[%c0_51, %c3_52, %c0_53, %c0_54] : memref<1x8x16x16xf32, #tpu.memory_space<vmem>>, vector<1x1x16x16xf32>
      %44 = vector.shape_cast %43 : vector<1x1x16x16xf32> to vector<16x16xf32>
      %c0_55 = arith.constant 0 : index
      %c4 = arith.constant 4 : index
      %c0_56 = arith.constant 0 : index
      %c0_57 = arith.constant 0 : index
      %45 = vector.load %arg3[%c0_55, %c4, %c0_56, %c0_57] : memref<1x8x16x16xf32, #tpu.memory_space<vmem>>, vector<1x1x16x16xf32>
      %46 = vector.shape_cast %45 : vector<1x1x16x16xf32> to vector<16x16xf32>
      %c0_58 = arith.constant 0 : index
      %c5 = arith.constant 5 : index
      %c0_59 = arith.constant 0 : index
      %c0_60 = arith.constant 0 : index
      %47 = vector.load %arg3[%c0_58, %c5, %c0_59, %c0_60] : memref<1x8x16x16xf32, #tpu.memory_space<vmem>>, vector<1x1x16x16xf32>
      %48 = vector.shape_cast %47 : vector<1x1x16x16xf32> to vector<16x16xf32>
      %c0_61 = arith.constant 0 : index
      %c6 = arith.constant 6 : index
      %c0_62 = arith.constant 0 : index
      %c0_63 = arith.constant 0 : index
      %49 = vector.load %arg3[%c0_61, %c6, %c0_62, %c0_63] : memref<1x8x16x16xf32, #tpu.memory_space<vmem>>, vector<1x1x16x16xf32>
      %50 = vector.shape_cast %49 : vector<1x1x16x16xf32> to vector<16x16xf32>
      %c0_64 = arith.constant 0 : index
      %c7 = arith.constant 7 : index
      %c0_65 = arith.constant 0 : index
      %c0_66 = arith.constant 0 : index
      %51 = vector.load %arg3[%c0_64, %c7, %c0_65, %c0_66] : memref<1x8x16x16xf32, #tpu.memory_space<vmem>>, vector<1x1x16x16xf32>
      %52 = vector.shape_cast %51 : vector<1x1x16x16xf32> to vector<16x16xf32>
      %c0_i32_67 = arith.constant 0 : i32
      %53 = arith.addi %0, %c0_i32_67 : i32
      %c8_i32 = arith.constant 8 : i32
      %54 = arith.muli %53, %c8_i32 : i32
      %55 = arith.index_cast %54 : i32 to index
      %56 = memref.load %arg7[%55] : memref<32xf32, #tpu.memory_space<smem>>
      %57 = vector.broadcast %56 : f32 to vector<16x16xf32>
      %58 = arith.mulf %57, %38 : vector<16x16xf32>
      %c8_i32_68 = arith.constant 8 : i32
      %59 = arith.muli %53, %c8_i32_68 : i32
      %c1_i32 = arith.constant 1 : i32
      %60 = arith.addi %59, %c1_i32 : i32
      %61 = arith.index_cast %60 : i32 to index
      %62 = memref.load %arg7[%61] : memref<32xf32, #tpu.memory_space<smem>>
      %63 = vector.broadcast %62 : f32 to vector<16x16xf32>
      %64 = arith.mulf %63, %40 : vector<16x16xf32>
      %65 = arith.addf %58, %64 : vector<16x16xf32>
      %c8_i32_69 = arith.constant 8 : i32
      %66 = arith.muli %53, %c8_i32_69 : i32
      %c2_i32 = arith.constant 2 : i32
      %67 = arith.addi %66, %c2_i32 : i32
      %68 = arith.index_cast %67 : i32 to index
      %69 = memref.load %arg7[%68] : memref<32xf32, #tpu.memory_space<smem>>
      %70 = vector.broadcast %69 : f32 to vector<16x16xf32>
      %71 = arith.mulf %70, %42 : vector<16x16xf32>
      %72 = arith.addf %65, %71 : vector<16x16xf32>
      %c8_i32_70 = arith.constant 8 : i32
      %73 = arith.muli %53, %c8_i32_70 : i32
      %c3_i32 = arith.constant 3 : i32
      %74 = arith.addi %73, %c3_i32 : i32
      %75 = arith.index_cast %74 : i32 to index
      %76 = memref.load %arg7[%75] : memref<32xf32, #tpu.memory_space<smem>>
      %77 = vector.broadcast %76 : f32 to vector<16x16xf32>
      %78 = arith.mulf %77, %44 : vector<16x16xf32>
      %79 = arith.addf %72, %78 : vector<16x16xf32>
      %c8_i32_71 = arith.constant 8 : i32
      %80 = arith.muli %53, %c8_i32_71 : i32
      %c4_i32_72 = arith.constant 4 : i32
      %81 = arith.addi %80, %c4_i32_72 : i32
      %82 = arith.index_cast %81 : i32 to index
      %83 = memref.load %arg7[%82] : memref<32xf32, #tpu.memory_space<smem>>
      %84 = vector.broadcast %83 : f32 to vector<16x16xf32>
      %85 = arith.mulf %84, %46 : vector<16x16xf32>
      %86 = arith.addf %79, %85 : vector<16x16xf32>
      %c8_i32_73 = arith.constant 8 : i32
      %87 = arith.muli %53, %c8_i32_73 : i32
      %c5_i32 = arith.constant 5 : i32
      %88 = arith.addi %87, %c5_i32 : i32
      %89 = arith.index_cast %88 : i32 to index
      %90 = memref.load %arg7[%89] : memref<32xf32, #tpu.memory_space<smem>>
      %91 = vector.broadcast %90 : f32 to vector<16x16xf32>
      %92 = arith.mulf %91, %48 : vector<16x16xf32>
      %93 = arith.addf %86, %92 : vector<16x16xf32>
      %c8_i32_74 = arith.constant 8 : i32
      %94 = arith.muli %53, %c8_i32_74 : i32
      %c6_i32 = arith.constant 6 : i32
      %95 = arith.addi %94, %c6_i32 : i32
      %96 = arith.index_cast %95 : i32 to index
      %97 = memref.load %arg7[%96] : memref<32xf32, #tpu.memory_space<smem>>
      %98 = vector.broadcast %97 : f32 to vector<16x16xf32>
      %99 = arith.mulf %98, %50 : vector<16x16xf32>
      %100 = arith.addf %93, %99 : vector<16x16xf32>
      %c8_i32_75 = arith.constant 8 : i32
      %101 = arith.muli %53, %c8_i32_75 : i32
      %c7_i32 = arith.constant 7 : i32
      %102 = arith.addi %101, %c7_i32 : i32
      %103 = arith.index_cast %102 : i32 to index
      %104 = memref.load %arg7[%103] : memref<32xf32, #tpu.memory_space<smem>>
      %105 = vector.broadcast %104 : f32 to vector<16x16xf32>
      %106 = arith.mulf %105, %52 : vector<16x16xf32>
      %107 = arith.addf %100, %106 : vector<16x16xf32>
      %108 = arith.index_cast %53 : i32 to index
      %109 = memref.load %arg8[%108] : memref<4xf32, #tpu.memory_space<smem>>
      %110 = vector.broadcast %109 : f32 to vector<16x16xf32>
      %111 = arith.addf %107, %110 : vector<16x16xf32>
      %c0_76 = arith.constant 0 : index
      %c0_77 = arith.constant 0 : index
      %112 = vector.load %arg10[%c0_76, %c0_77] : memref<64x16xf32, #tpu.memory_space<vmem>>, vector<16x16xf32>
      tpu.vector_store %arg10[%c0_76, %c0_77], %111 {strides = array<i32>} : memref<64x16xf32, #tpu.memory_space<vmem>>, vector<16x16xf32>,
      %c1_i32_78 = arith.constant 1 : i32
      %113 = arith.addi %0, %c1_i32_78 : i32
      %c8_i32_79 = arith.constant 8 : i32
      %114 = arith.muli %113, %c8_i32_79 : i32
      %115 = arith.index_cast %114 : i32 to index
      %116 = memref.load %arg7[%115] : memref<32xf32, #tpu.memory_space<smem>>
      %117 = vector.broadcast %116 : f32 to vector<16x16xf32>
      %118 = arith.mulf %117, %38 : vector<16x16xf32>
      %c8_i32_80 = arith.constant 8 : i32
      %119 = arith.muli %113, %c8_i32_80 : i32
      %c1_i32_81 = arith.constant 1 : i32
      %120 = arith.addi %119, %c1_i32_81 : i32
      %121 = arith.index_cast %120 : i32 to index
      %122 = memref.load %arg7[%121] : memref<32xf32, #tpu.memory_space<smem>>
      %123 = vector.broadcast %122 : f32 to vector<16x16xf32>
      %124 = arith.mulf %123, %40 : vector<16x16xf32>
      %125 = arith.addf %118, %124 : vector<16x16xf32>
      %c8_i32_82 = arith.constant 8 : i32
      %126 = arith.muli %113, %c8_i32_82 : i32
      %c2_i32_83 = arith.constant 2 : i32
      %127 = arith.addi %126, %c2_i32_83 : i32
      %128 = arith.index_cast %127 : i32 to index
      %129 = memref.load %arg7[%128] : memref<32xf32, #tpu.memory_space<smem>>
      %130 = vector.broadcast %129 : f32 to vector<16x16xf32>
      %131 = arith.mulf %130, %42 : vector<16x16xf32>
      %132 = arith.addf %125, %131 : vector<16x16xf32>
      %c8_i32_84 = arith.constant 8 : i32
      %133 = arith.muli %113, %c8_i32_84 : i32
      %c3_i32_85 = arith.constant 3 : i32
      %134 = arith.addi %133, %c3_i32_85 : i32
      %135 = arith.index_cast %134 : i32 to index
      %136 = memref.load %arg7[%135] : memref<32xf32, #tpu.memory_space<smem>>
      %137 = vector.broadcast %136 : f32 to vector<16x16xf32>
      %138 = arith.mulf %137, %44 : vector<16x16xf32>
      %139 = arith.addf %132, %138 : vector<16x16xf32>
      %c8_i32_86 = arith.constant 8 : i32
      %140 = arith.muli %113, %c8_i32_86 : i32
      %c4_i32_87 = arith.constant 4 : i32
      %141 = arith.addi %140, %c4_i32_87 : i32
      %142 = arith.index_cast %141 : i32 to index
      %143 = memref.load %arg7[%142] : memref<32xf32, #tpu.memory_space<smem>>
      %144 = vector.broadcast %143 : f32 to vector<16x16xf32>
      %145 = arith.mulf %144, %46 : vector<16x16xf32>
      %146 = arith.addf %139, %145 : vector<16x16xf32>
      %c8_i32_88 = arith.constant 8 : i32
      %147 = arith.muli %113, %c8_i32_88 : i32
      %c5_i32_89 = arith.constant 5 : i32
      %148 = arith.addi %147, %c5_i32_89 : i32
      %149 = arith.index_cast %148 : i32 to index
      %150 = memref.load %arg7[%149] : memref<32xf32, #tpu.memory_space<smem>>
      %151 = vector.broadcast %150 : f32 to vector<16x16xf32>
      %152 = arith.mulf %151, %48 : vector<16x16xf32>
      %153 = arith.addf %146, %152 : vector<16x16xf32>
      %c8_i32_90 = arith.constant 8 : i32
      %154 = arith.muli %113, %c8_i32_90 : i32
      %c6_i32_91 = arith.constant 6 : i32
      %155 = arith.addi %154, %c6_i32_91 : i32
      %156 = arith.index_cast %155 : i32 to index
      %157 = memref.load %arg7[%156] : memref<32xf32, #tpu.memory_space<smem>>
      %158 = vector.broadcast %157 : f32 to vector<16x16xf32>
      %159 = arith.mulf %158, %50 : vector<16x16xf32>
      %160 = arith.addf %153, %159 : vector<16x16xf32>
      %c8_i32_92 = arith.constant 8 : i32
      %161 = arith.muli %113, %c8_i32_92 : i32
      %c7_i32_93 = arith.constant 7 : i32
      %162 = arith.addi %161, %c7_i32_93 : i32
      %163 = arith.index_cast %162 : i32 to index
      %164 = memref.load %arg7[%163] : memref<32xf32, #tpu.memory_space<smem>>
      %165 = vector.broadcast %164 : f32 to vector<16x16xf32>
      %166 = arith.mulf %165, %52 : vector<16x16xf32>
      %167 = arith.addf %160, %166 : vector<16x16xf32>
      %168 = arith.index_cast %113 : i32 to index
      %169 = memref.load %arg8[%168] : memref<4xf32, #tpu.memory_space<smem>>
      %170 = vector.broadcast %169 : f32 to vector<16x16xf32>
      %171 = arith.addf %167, %170 : vector<16x16xf32>
      %c16_94 = arith.constant 16 : index
      %c0_95 = arith.constant 0 : index
      %172 = vector.load %arg10[%c16_94, %c0_95] : memref<64x16xf32, #tpu.memory_space<vmem>>, vector<16x16xf32>
      tpu.vector_store %arg10[%c16_94, %c0_95], %171 {strides = array<i32>} : memref<64x16xf32, #tpu.memory_space<vmem>>, vector<16x16xf32>,
      %c2_i32_96 = arith.constant 2 : i32
      %173 = arith.addi %0, %c2_i32_96 : i32
      %c8_i32_97 = arith.constant 8 : i32
      %174 = arith.muli %173, %c8_i32_97 : i32
      %175 = arith.index_cast %174 : i32 to index
      %176 = memref.load %arg7[%175] : memref<32xf32, #tpu.memory_space<smem>>
      %177 = vector.broadcast %176 : f32 to vector<16x16xf32>
      %178 = arith.mulf %177, %38 : vector<16x16xf32>
      %c8_i32_98 = arith.constant 8 : i32
      %179 = arith.muli %173, %c8_i32_98 : i32
      %c1_i32_99 = arith.constant 1 : i32
      %180 = arith.addi %179, %c1_i32_99 : i32
      %181 = arith.index_cast %180 : i32 to index
      %182 = memref.load %arg7[%181] : memref<32xf32, #tpu.memory_space<smem>>
      %183 = vector.broadcast %182 : f32 to vector<16x16xf32>
      %184 = arith.mulf %183, %40 : vector<16x16xf32>
      %185 = arith.addf %178, %184 : vector<16x16xf32>
      %c8_i32_100 = arith.constant 8 : i32
      %186 = arith.muli %173, %c8_i32_100 : i32
      %c2_i32_101 = arith.constant 2 : i32
      %187 = arith.addi %186, %c2_i32_101 : i32
      %188 = arith.index_cast %187 : i32 to index
      %189 = memref.load %arg7[%188] : memref<32xf32, #tpu.memory_space<smem>>
      %190 = vector.broadcast %189 : f32 to vector<16x16xf32>
      %191 = arith.mulf %190, %42 : vector<16x16xf32>
      %192 = arith.addf %185, %191 : vector<16x16xf32>
      %c8_i32_102 = arith.constant 8 : i32
      %193 = arith.muli %173, %c8_i32_102 : i32
      %c3_i32_103 = arith.constant 3 : i32
      %194 = arith.addi %193, %c3_i32_103 : i32
      %195 = arith.index_cast %194 : i32 to index
      %196 = memref.load %arg7[%195] : memref<32xf32, #tpu.memory_space<smem>>
      %197 = vector.broadcast %196 : f32 to vector<16x16xf32>
      %198 = arith.mulf %197, %44 : vector<16x16xf32>
      %199 = arith.addf %192, %198 : vector<16x16xf32>
      %c8_i32_104 = arith.constant 8 : i32
      %200 = arith.muli %173, %c8_i32_104 : i32
      %c4_i32_105 = arith.constant 4 : i32
      %201 = arith.addi %200, %c4_i32_105 : i32
      %202 = arith.index_cast %201 : i32 to index
      %203 = memref.load %arg7[%202] : memref<32xf32, #tpu.memory_space<smem>>
      %204 = vector.broadcast %203 : f32 to vector<16x16xf32>
      %205 = arith.mulf %204, %46 : vector<16x16xf32>
      %206 = arith.addf %199, %205 : vector<16x16xf32>
      %c8_i32_106 = arith.constant 8 : i32
      %207 = arith.muli %173, %c8_i32_106 : i32
      %c5_i32_107 = arith.constant 5 : i32
      %208 = arith.addi %207, %c5_i32_107 : i32
      %209 = arith.index_cast %208 : i32 to index
      %210 = memref.load %arg7[%209] : memref<32xf32, #tpu.memory_space<smem>>
      %211 = vector.broadcast %210 : f32 to vector<16x16xf32>
      %212 = arith.mulf %211, %48 : vector<16x16xf32>
      %213 = arith.addf %206, %212 : vector<16x16xf32>
      %c8_i32_108 = arith.constant 8 : i32
      %214 = arith.muli %173, %c8_i32_108 : i32
      %c6_i32_109 = arith.constant 6 : i32
      %215 = arith.addi %214, %c6_i32_109 : i32
      %216 = arith.index_cast %215 : i32 to index
      %217 = memref.load %arg7[%216] : memref<32xf32, #tpu.memory_space<smem>>
      %218 = vector.broadcast %217 : f32 to vector<16x16xf32>
      %219 = arith.mulf %218, %50 : vector<16x16xf32>
      %220 = arith.addf %213, %219 : vector<16x16xf32>
      %c8_i32_110 = arith.constant 8 : i32
      %221 = arith.muli %173, %c8_i32_110 : i32
      %c7_i32_111 = arith.constant 7 : i32
      %222 = arith.addi %221, %c7_i32_111 : i32
      %223 = arith.index_cast %222 : i32 to index
      %224 = memref.load %arg7[%223] : memref<32xf32, #tpu.memory_space<smem>>
      %225 = vector.broadcast %224 : f32 to vector<16x16xf32>
      %226 = arith.mulf %225, %52 : vector<16x16xf32>
      %227 = arith.addf %220, %226 : vector<16x16xf32>
      %228 = arith.index_cast %173 : i32 to index
      %229 = memref.load %arg8[%228] : memref<4xf32, #tpu.memory_space<smem>>
      %230 = vector.broadcast %229 : f32 to vector<16x16xf32>
      %231 = arith.addf %227, %230 : vector<16x16xf32>
      %c32_112 = arith.constant 32 : index
      %c0_113 = arith.constant 0 : index
      %232 = vector.load %arg10[%c32_112, %c0_113] : memref<64x16xf32, #tpu.memory_space<vmem>>, vector<16x16xf32>
      tpu.vector_store %arg10[%c32_112, %c0_113], %231 {strides = array<i32>} : memref<64x16xf32, #tpu.memory_space<vmem>>, vector<16x16xf32>,
      %c3_i32_114 = arith.constant 3 : i32
      %233 = arith.addi %0, %c3_i32_114 : i32
      %c8_i32_115 = arith.constant 8 : i32
      %234 = arith.muli %233, %c8_i32_115 : i32
      %235 = arith.index_cast %234 : i32 to index
      %236 = memref.load %arg7[%235] : memref<32xf32, #tpu.memory_space<smem>>
      %237 = vector.broadcast %236 : f32 to vector<16x16xf32>
      %238 = arith.mulf %237, %38 : vector<16x16xf32>
      %c8_i32_116 = arith.constant 8 : i32
      %239 = arith.muli %233, %c8_i32_116 : i32
      %c1_i32_117 = arith.constant 1 : i32
      %240 = arith.addi %239, %c1_i32_117 : i32
      %241 = arith.index_cast %240 : i32 to index
      %242 = memref.load %arg7[%241] : memref<32xf32, #tpu.memory_space<smem>>
      %243 = vector.broadcast %242 : f32 to vector<16x16xf32>
      %244 = arith.mulf %243, %40 : vector<16x16xf32>
      %245 = arith.addf %238, %244 : vector<16x16xf32>
      %c8_i32_118 = arith.constant 8 : i32
      %246 = arith.muli %233, %c8_i32_118 : i32
      %c2_i32_119 = arith.constant 2 : i32
      %247 = arith.addi %246, %c2_i32_119 : i32
      %248 = arith.index_cast %247 : i32 to index
      %249 = memref.load %arg7[%248] : memref<32xf32, #tpu.memory_space<smem>>
      %250 = vector.broadcast %249 : f32 to vector<16x16xf32>
      %251 = arith.mulf %250, %42 : vector<16x16xf32>
      %252 = arith.addf %245, %251 : vector<16x16xf32>
      %c8_i32_120 = arith.constant 8 : i32
      %253 = arith.muli %233, %c8_i32_120 : i32
      %c3_i32_121 = arith.constant 3 : i32
      %254 = arith.addi %253, %c3_i32_121 : i32
      %255 = arith.index_cast %254 : i32 to index
      %256 = memref.load %arg7[%255] : memref<32xf32, #tpu.memory_space<smem>>
      %257 = vector.broadcast %256 : f32 to vector<16x16xf32>
      %258 = arith.mulf %257, %44 : vector<16x16xf32>
      %259 = arith.addf %252, %258 : vector<16x16xf32>
      %c8_i32_122 = arith.constant 8 : i32
      %260 = arith.muli %233, %c8_i32_122 : i32
      %c4_i32_123 = arith.constant 4 : i32
      %261 = arith.addi %260, %c4_i32_123 : i32
      %262 = arith.index_cast %261 : i32 to index
      %263 = memref.load %arg7[%262] : memref<32xf32, #tpu.memory_space<smem>>
      %264 = vector.broadcast %263 : f32 to vector<16x16xf32>
      %265 = arith.mulf %264, %46 : vector<16x16xf32>
      %266 = arith.addf %259, %265 : vector<16x16xf32>
      %c8_i32_124 = arith.constant 8 : i32
      %267 = arith.muli %233, %c8_i32_124 : i32
      %c5_i32_125 = arith.constant 5 : i32
      %268 = arith.addi %267, %c5_i32_125 : i32
      %269 = arith.index_cast %268 : i32 to index
      %270 = memref.load %arg7[%269] : memref<32xf32, #tpu.memory_space<smem>>
      %271 = vector.broadcast %270 : f32 to vector<16x16xf32>
      %272 = arith.mulf %271, %48 : vector<16x16xf32>
      %273 = arith.addf %266, %272 : vector<16x16xf32>
      %c8_i32_126 = arith.constant 8 : i32
      %274 = arith.muli %233, %c8_i32_126 : i32
      %c6_i32_127 = arith.constant 6 : i32
      %275 = arith.addi %274, %c6_i32_127 : i32
      %276 = arith.index_cast %275 : i32 to index
      %277 = memref.load %arg7[%276] : memref<32xf32, #tpu.memory_space<smem>>
      %278 = vector.broadcast %277 : f32 to vector<16x16xf32>
      %279 = arith.mulf %278, %50 : vector<16x16xf32>
      %280 = arith.addf %273, %279 : vector<16x16xf32>
      %c8_i32_128 = arith.constant 8 : i32
      %281 = arith.muli %233, %c8_i32_128 : i32
      %c7_i32_129 = arith.constant 7 : i32
      %282 = arith.addi %281, %c7_i32_129 : i32
      %283 = arith.index_cast %282 : i32 to index
      %284 = memref.load %arg7[%283] : memref<32xf32, #tpu.memory_space<smem>>
      %285 = vector.broadcast %284 : f32 to vector<16x16xf32>
      %286 = arith.mulf %285, %52 : vector<16x16xf32>
      %287 = arith.addf %280, %286 : vector<16x16xf32>
      %288 = arith.index_cast %233 : i32 to index
      %289 = memref.load %arg8[%288] : memref<4xf32, #tpu.memory_space<smem>>
      %290 = vector.broadcast %289 : f32 to vector<16x16xf32>
      %291 = arith.addf %287, %290 : vector<16x16xf32>
      %c48_130 = arith.constant 48 : index
      %c0_131 = arith.constant 0 : index
      %292 = vector.load %arg10[%c48_130, %c0_131] : memref<64x16xf32, #tpu.memory_space<vmem>>, vector<16x16xf32>
      tpu.vector_store %arg10[%c48_130, %c0_131], %291 {strides = array<i32>} : memref<64x16xf32, #tpu.memory_space<vmem>>, vector<16x16xf32>,
      %c0_132 = arith.constant 0 : index
      %c0_133 = arith.constant 0 : index
      %293 = vector.load %arg10[%c0_132, %c0_133] : memref<64x16xf32, #tpu.memory_space<vmem>>, vector<64x16xf32>
      %c0_134 = arith.constant 0 : index
      %c0_135 = arith.constant 0 : index
      %294 = vector.load %arg6[%c0_134, %c0_135] : memref<16x32xf32, #tpu.memory_space<vmem>>, vector<16x32xf32>
      %cst_136 = arith.constant dense<0.000000e+00> : vector<64x32xf32>
      %295 = tpu.matmul %293, %294, %cst_136 {dimension_numbers = #tpu.dot_dimension_numbers<[1], [0], [0], [1], [0, 0, 1, 1], [], []>} : vector<64x16xf32>, vector<16x32xf32>, vector<64x32xf32> -> vector<64x32xf32>
      %c0_137 = arith.constant 0 : index
      %c0_138 = arith.constant 0 : index
      %296 = vector.load %arg11[%c0_137, %c0_138] : memref<64x32xf32, #tpu.memory_space<vmem>>, vector<64x32xf32>
      tpu.vector_store %arg11[%c0_137, %c0_138], %295 {strides = array<i32>} : memref<64x32xf32, #tpu.memory_space<vmem>>, vector<64x32xf32>,
    } else {
    }
    %c0 = arith.constant 0 : index
    %c0_1 = arith.constant 0 : index
    %4 = vector.load %arg5[%c0, %c0_1] : memref<32x16xf32, #tpu.memory_space<vmem>>, vector<32x16xf32>
    %c0_2 = arith.constant 0 : index
    %c0_3 = arith.constant 0 : index
    %5 = vector.load %arg11[%c0_2, %c0_3] : memref<64x32xf32, #tpu.memory_space<vmem>>, vector<16x32xf32>
    %cst = arith.constant dense<0.000000e+00> : vector<32x32xf32>
    %6 = tpu.matmul %4, %5, %cst {dimension_numbers = #tpu.dot_dimension_numbers<[1], [0], [0], [1], [0, 0, 1, 1], [], []>} : vector<32x16xf32>, vector<16x32xf32>, vector<32x32xf32> -> vector<32x32xf32>
    %c0_4 = arith.constant 0 : index
    %c0_5 = arith.constant 0 : index
    %c0_6 = arith.constant 0 : index
    %c0_7 = arith.constant 0 : index
    %7 = vector.load %arg4[%c0_4, %c0_5, %c0_6, %c0_7] : memref<1x4x32x32xf32, #tpu.memory_space<vmem>>, vector<1x1x32x32xf32>
    %8 = vector.shape_cast %7 : vector<1x1x32x32xf32> to vector<32x32xf32>
    %9 = arith.addf %6, %8 : vector<32x32xf32>
    %c0_8 = arith.constant 0 : index
    %c0_9 = arith.constant 0 : index
    %c0_10 = arith.constant 0 : index
    %c0_11 = arith.constant 0 : index
    %10 = vector.load %arg9[%c0_8, %c0_9, %c0_10, %c0_11] : memref<1x4x32x32xf32, #tpu.memory_space<vmem>>, vector<1x1x32x32xf32>
    %11 = vector.shape_cast %10 : vector<1x1x32x32xf32> to vector<32x32xf32>
    %12 = vector.shape_cast %9 : vector<32x32xf32> to vector<1x1x32x32xf32>
    tpu.vector_store %arg9[%c0_8, %c0_9, %c0_10, %c0_11], %12 {strides = array<i32>} : memref<1x4x32x32xf32, #tpu.memory_space<vmem>>, vector<1x1x32x32xf32>,
    %c16 = arith.constant 16 : index
    %c0_12 = arith.constant 0 : index
    %13 = vector.load %arg11[%c16, %c0_12] : memref<64x32xf32, #tpu.memory_space<vmem>>, vector<16x32xf32>
    %cst_13 = arith.constant dense<0.000000e+00> : vector<32x32xf32>
    %14 = tpu.matmul %4, %13, %cst_13 {dimension_numbers = #tpu.dot_dimension_numbers<[1], [0], [0], [1], [0, 0, 1, 1], [], []>} : vector<32x16xf32>, vector<16x32xf32>, vector<32x32xf32> -> vector<32x32xf32>
    %c0_14 = arith.constant 0 : index
    %c1 = arith.constant 1 : index
    %c0_15 = arith.constant 0 : index
    %c0_16 = arith.constant 0 : index
    %15 = vector.load %arg4[%c0_14, %c1, %c0_15, %c0_16] : memref<1x4x32x32xf32, #tpu.memory_space<vmem>>, vector<1x1x32x32xf32>
    %16 = vector.shape_cast %15 : vector<1x1x32x32xf32> to vector<32x32xf32>
    %17 = arith.addf %14, %16 : vector<32x32xf32>
    %c0_17 = arith.constant 0 : index
    %c1_18 = arith.constant 1 : index
    %c0_19 = arith.constant 0 : index
    %c0_20 = arith.constant 0 : index
    %18 = vector.load %arg9[%c0_17, %c1_18, %c0_19, %c0_20] : memref<1x4x32x32xf32, #tpu.memory_space<vmem>>, vector<1x1x32x32xf32>
    %19 = vector.shape_cast %18 : vector<1x1x32x32xf32> to vector<32x32xf32>
    %20 = vector.shape_cast %17 : vector<32x32xf32> to vector<1x1x32x32xf32>
    tpu.vector_store %arg9[%c0_17, %c1_18, %c0_19, %c0_20], %20 {strides = array<i32>} : memref<1x4x32x32xf32, #tpu.memory_space<vmem>>, vector<1x1x32x32xf32>,
    %c32 = arith.constant 32 : index
    %c0_21 = arith.constant 0 : index
    %21 = vector.load %arg11[%c32, %c0_21] : memref<64x32xf32, #tpu.memory_space<vmem>>, vector<16x32xf32>
    %cst_22 = arith.constant dense<0.000000e+00> : vector<32x32xf32>
    %22 = tpu.matmul %4, %21, %cst_22 {dimension_numbers = #tpu.dot_dimension_numbers<[1], [0], [0], [1], [0, 0, 1, 1], [], []>} : vector<32x16xf32>, vector<16x32xf32>, vector<32x32xf32> -> vector<32x32xf32>
    %c0_23 = arith.constant 0 : index
    %c2 = arith.constant 2 : index
    %c0_24 = arith.constant 0 : index
    %c0_25 = arith.constant 0 : index
    %23 = vector.load %arg4[%c0_23, %c2, %c0_24, %c0_25] : memref<1x4x32x32xf32, #tpu.memory_space<vmem>>, vector<1x1x32x32xf32>
    %24 = vector.shape_cast %23 : vector<1x1x32x32xf32> to vector<32x32xf32>
    %25 = arith.addf %22, %24 : vector<32x32xf32>
    %c0_26 = arith.constant 0 : index
    %c2_27 = arith.constant 2 : index
    %c0_28 = arith.constant 0 : index
    %c0_29 = arith.constant 0 : index
    %26 = vector.load %arg9[%c0_26, %c2_27, %c0_28, %c0_29] : memref<1x4x32x32xf32, #tpu.memory_space<vmem>>, vector<1x1x32x32xf32>
    %27 = vector.shape_cast %26 : vector<1x1x32x32xf32> to vector<32x32xf32>
    %28 = vector.shape_cast %25 : vector<32x32xf32> to vector<1x1x32x32xf32>
    tpu.vector_store %arg9[%c0_26, %c2_27, %c0_28, %c0_29], %28 {strides = array<i32>} : memref<1x4x32x32xf32, #tpu.memory_space<vmem>>, vector<1x1x32x32xf32>,
    %c48 = arith.constant 48 : index
    %c0_30 = arith.constant 0 : index
    %29 = vector.load %arg11[%c48, %c0_30] : memref<64x32xf32, #tpu.memory_space<vmem>>, vector<16x32xf32>
    %cst_31 = arith.constant dense<0.000000e+00> : vector<32x32xf32>
    %30 = tpu.matmul %4, %29, %cst_31 {dimension_numbers = #tpu.dot_dimension_numbers<[1], [0], [0], [1], [0, 0, 1, 1], [], []>} : vector<32x16xf32>, vector<16x32xf32>, vector<32x32xf32> -> vector<32x32xf32>
    %c0_32 = arith.constant 0 : index
    %c3 = arith.constant 3 : index
    %c0_33 = arith.constant 0 : index
    %c0_34 = arith.constant 0 : index
    %31 = vector.load %arg4[%c0_32, %c3, %c0_33, %c0_34] : memref<1x4x32x32xf32, #tpu.memory_space<vmem>>, vector<1x1x32x32xf32>
    %32 = vector.shape_cast %31 : vector<1x1x32x32xf32> to vector<32x32xf32>
    %33 = arith.addf %30, %32 : vector<32x32xf32>
    %c0_35 = arith.constant 0 : index
    %c3_36 = arith.constant 3 : index
    %c0_37 = arith.constant 0 : index
    %c0_38 = arith.constant 0 : index
    %34 = vector.load %arg9[%c0_35, %c3_36, %c0_37, %c0_38] : memref<1x4x32x32xf32, #tpu.memory_space<vmem>>, vector<1x1x32x32xf32>
    %35 = vector.shape_cast %34 : vector<1x1x32x32xf32> to vector<32x32xf32>
    %36 = vector.shape_cast %33 : vector<32x32xf32> to vector<1x1x32x32xf32>
    tpu.vector_store %arg9[%c0_35, %c3_36, %c0_37, %c0_38], %36 {strides = array<i32>} : memref<1x4x32x32xf32, #tpu.memory_space<vmem>>, vector<1x1x32x32xf32>,
    return
  }
  func.func @transform_0(%arg0: i32, %arg1: i32, %arg2: i32) -> (i32, i32, i32, i32) {
    %c0_i32 = arith.constant 0 : i32
    %c0_i32_0 = arith.constant 0 : i32
    %c0_i32_1 = arith.constant 0 : i32
    %c0_i32_2 = arith.constant 0 : i32
    return %arg0, %c0_i32, %c0_i32_0, %c0_i32_1 : i32, i32, i32, i32
  }
  func.func @transform_1(%arg0: i32, %arg1: i32, %arg2: i32) -> (i32, i32, i32, i32) {
    %c0_i32 = arith.constant 0 : i32
    %c0_i32_0 = arith.constant 0 : i32
    return %arg0, %arg1, %arg2, %c0_i32 : i32, i32, i32, i32
  }
  func.func @transform_2(%arg0: i32, %arg1: i32, %arg2: i32) -> (i32, i32) {
    %c0_i32 = arith.constant 0 : i32
    %c0_i32_0 = arith.constant 0 : i32
    return %arg2, %c0_i32 : i32, i32
  }
  func.func @transform_3(%arg0: i32, %arg1: i32, %arg2: i32) -> (i32, i32) {
    %c0_i32 = arith.constant 0 : i32
    %c0_i32_0 = arith.constant 0 : i32
    %c0_i32_1 = arith.constant 0 : i32
    return %c0_i32, %c0_i32_0 : i32, i32
  }
  func.func @transform_4(%arg0: i32, %arg1: i32, %arg2: i32) -> i32 {
    %c0_i32 = arith.constant 0 : i32
    %c0_i32_0 = arith.constant 0 : i32
    return %c0_i32 : i32
  }
  func.func @transform_5(%arg0: i32, %arg1: i32, %arg2: i32) -> i32 {
    %c0_i32 = arith.constant 0 : i32
    %c0_i32_0 = arith.constant 0 : i32
    return %c0_i32 : i32
  }
  func.func @transform_6(%arg0: i32, %arg1: i32, %arg2: i32) -> (i32, i32, i32, i32) {
    %c0_i32 = arith.constant 0 : i32
    %c0_i32_0 = arith.constant 0 : i32
    return %arg0, %arg1, %arg2, %c0_i32 : i32, i32, i32, i32
  }
}

</mosaic_0001>

<llo_original>
// kernel: tpu_custom_call.1
$region0: #{tpu_custom_call.1}
  #allocation0 [shape = 'u32[]', space=smem, size = 0x4, offset = 0x4, fixed_abs, tag = 'smem constant byte address 0x4 - core index']
  #allocation1 [shape = 'u32[144,128]{1,0:T(1,128)}', space=vmem, size = 0x12000, scoped, tag = 'internal scratch']
  #allocation2 [shape = 'f32[64,16]{1,0:T(8,128)}', space=vmem, size = 0x8000, scoped, tag = 'scratch operand']
  #allocation3 [shape = 'f32[64,32]{1,0:T(8,128)}', space=vmem, size = 0x8000, scoped, tag = 'scratch operand']
  %s0 = inlined_call_operand.hbm [shape: f32[2,8,16,16], index: 0, kind: input, shape index: {}]
  %s1 = inlined_call_operand.hbm [shape: f32[2,4,32,32], index: 1, kind: input, shape index: {}]
  %s2 = inlined_call_operand.vmem [shape: f32[32,16], index: 2, kind: input, shape index: {}]
  %s3 = inlined_call_operand.vmem [shape: f32[16,32], index: 3, kind: input, shape index: {}]
  %s4 = inlined_call_operand.vmem [shape: f32[32], index: 4, kind: input, shape index: {}]
  %s5 = inlined_call_operand.vmem [shape: f32[4], index: 5, kind: input, shape index: {}]
  %s6 = inlined_call_operand.hbm [shape: f32[2,4,32,32], index: 6, kind: output, shape index: {}]
  %s7 = sld [smem:[#allocation0]]
  $region77: #{tpu_custom_call.1} parent=0
    _
  %s9 = ssub.s32 1, %s7
  %s10 = scalar_select 0, %s9, %s7
  $region1: #{tpu_custom_call.1} parent=0
    #allocation4 [shape = 'u8[131072]{0}', space=vmem, size = 0x20000, scoped, tag = 'input window, operand 0']
    #allocation5 [shape = 's32[2]{0}', space=sflag, size = 0x8, scoped, tag = 'scoped memory for tpu_custom_call.1']
    #allocation6 [shape = 's32[2]{0}', space=sflag, size = 0x8, scoped, tag = 'scoped memory for tpu_custom_call.1']
    #allocation7 [shape = 's32[2]{0}', space=sflag, size = 0x8, scoped, tag = 'scoped memory for tpu_custom_call.1']
    #allocation8 [shape = 'u8[131072]{0}', space=vmem, size = 0x20000, scoped, tag = 'input window, operand 1']
    #allocation9 [shape = 's32[2]{0}', space=sflag, size = 0x8, scoped, tag = 'scoped memory for tpu_custom_call.1']
    #allocation10 [shape = 'u8[512]{0}', space=smem, size = 0x200, scoped, tag = 'input window, operand 4, single buffered']
    #allocation11 [shape = 'u8[512]{0}', space=smem, size = 0x200, scoped, tag = 'input window, operand 5, single buffered']
    #allocation12 [shape = 's32[1]{0}', space=sflag, size = 0x4, scoped, tag = 'scoped memory for tpu_custom_call.1']
    #allocation13 [shape = 'u8[131072]{0}', space=vmem, size = 0x20000, scoped, tag = 'output window, operand 0']
    %11 = vsyncpa [#allocation5], 0
    %s12 = scalar_lea.sflag [#allocation5], 1
    %13 = vsyncpa %s12, 0
    %14 = vsyncpa [#allocation9], 0
    %s15 = scalar_lea.sflag [#allocation9], 1
    %16 = vsyncpa %s15, 0
    %17 = vsyncpa [#allocation7], 0
    %18 = vsyncpa [#allocation12], 0
    %19 = vsyncpa [#allocation6], 0
    %s20 = scalar_lea.sflag [#allocation6], 1
    %21 = vsyncpa %s20, 0
    loop: start=0, step=1, limit=4
    $region2: #{tpu_custom_call.1} parent=1 // loop_pre_header
      _
    $region3: #{tpu_custom_call.1} parent=1 // loop_header
      %s23 = sphi 0, %s27
      %p24 = scmp.ge.s32.totalorder %s23, 4
      %s30 = sphi 0, %s49
      %s31 = sphi 0, %s45
      %s32 = sphi 0, %s41
      %s33 = sphi 0, %s30
      %s34 = sphi 0, %s31
      %s35 = sphi 0, %s32
      %s36 = sphi 0, %s33
      %s37 = sphi 0, %s34
      %s38 = sphi 0, %s35
      %s52 = sphi 0, %s54
      %s55 = sphi 0, %s52
      %s56 = sphi 0, %s55
      %s72 = sphi 0, %s56
      %s82 = sphi 0, %s84
      %s85 = sphi 0, %s82
      %s86 = sphi 0, %s85
      %s102 = sphi 0, %s86
      %s108 = sphi 0, %s110
      %s111 = sphi 0, %s108
      %s112 = sphi 0, %s111
      %s128 = sphi 0, %s112
      %s132 = sphi 0, %s132
      %s134 = sphi 0, %s132
      %s135 = sphi 0, %s134
      %s149 = sphi 0, %s135
      %s153 = sphi 0, %s153
      %s155 = sphi 0, %s153
      %s156 = sphi 0, %s155
      %s170 = sphi 0, %s156
      %s174 = sphi 0, %s174
      %s176 = sphi 0, %s174
      %s177 = sphi 0, %s176
      %s191 = sphi 0, %s177
      %s201 = sphi 0, %s203
      %s204 = sphi 0, %s201
      %s205 = sphi 0, %s204
      %s221 = sphi 0, %s205
    $region4: #{tpu_custom_call.1} parent=1 // loop_header_branch
      %26 = sbr.rel (%p24) target = $region8
    $region5: #{tpu_custom_call.1} parent=1 // loop_body
      %s28 = ssub.s32 %s23, 1
      %s29 = ssub.s32 %s23, 2
      %s39 = sadd.s32 1, %s32
      %p40 = scmp.ge.s32.totalorder %s39, 1
      %s41 = scalar_select %p40, 0, %s39
      %s42 = sadd.s32 1, %s31
      %s43 = scalar_select %p40, %s42, %s31
      %p44 = scmp.ge.s32.totalorder %s43, 1
      %s45 = scalar_select %p44, 0, %s43
      %s46 = sadd.s32 1, %s30
      %s47 = scalar_select %p44, %s46, %s30
      %p48 = scmp.ge.s32.totalorder %s47, 2
      %s49 = scalar_select %p48, 0, %s47
      %s50 = ssub.s32 %s30, %s49
      %p51 = scmp.eq.s32.totalorder %s50, 0
      %s53 = sadd.s32 %s52, 1
      %s54 = scalar_select %p51, %s52, %s53
      %p57 = pneg %p51
      %p58 = scmp.eq.s32.totalorder %s23, 1
      %p59 = por %p57, %p58
      %p60 = scmp.ne.s32.totalorder %s52, %s55
      %p61 = scmp.eq.s32.totalorder %s23, 0
      %p62 = por %p60, %p61
      %p63 = scmp.ne.s32.totalorder %s52, %s55
      %p64 = scmp.eq.s32.totalorder %s28, 1
      %p65 = por %p63, %p64
      %p66 = scmp.ne.s32.totalorder %s55, %s56
      %p67 = scmp.eq.s32.totalorder %s28, 0
      %p68 = por %p66, %p67
      %p69 = scmp.ne.s32.totalorder %s55, %s56
      %p70 = scmp.eq.s32.totalorder %s29, 1
      %p71 = por %p69, %p70
      %p73 = scmp.ne.s32.totalorder %s56, %s72
      %p74 = scmp.eq.s32.totalorder %s29, 0
      %p75 = por %p73, %p74
      %s76 = ssub.s32 %s30, %s49
      %s77 = ssub.s32 %s31, %s45
      %s78 = sor.u32 %s76, %s77
      %s79 = ssub.s32 %s32, %s41
      %s80 = sor.u32 %s78, %s79
      %p81 = scmp.eq.s32.totalorder %s80, 0
      %s83 = sadd.s32 %s82, 1
      %s84 = scalar_select %p81, %s82, %s83
      %p87 = pneg %p81
      %p88 = scmp.eq.s32.totalorder %s23, 1
      %p89 = por %p87, %p88
      %p90 = scmp.ne.s32.totalorder %s82, %s85
      %p91 = scmp.eq.s32.totalorder %s23, 0
      %p92 = por %p90, %p91
      %p93 = scmp.ne.s32.totalorder %s82, %s85
      %p94 = scmp.eq.s32.totalorder %s28, 1
      %p95 = por %p93, %p94
      %p96 = scmp.ne.s32.totalorder %s85, %s86
      %p97 = scmp.eq.s32.totalorder %s28, 0
      %p98 = por %p96, %p97
      %p99 = scmp.ne.s32.totalorder %s85, %s86
      %p100 = scmp.eq.s32.totalorder %s29, 1
      %p101 = por %p99, %p100
      %p103 = scmp.ne.s32.totalorder %s86, %s102
      %p104 = scmp.eq.s32.totalorder %s29, 0
      %p105 = por %p103, %p104
      %s106 = ssub.s32 %s32, %s41
      %p107 = scmp.eq.s32.totalorder %s106, 0
      %s109 = sadd.s32 %s108, 1
      %s110 = scalar_select %p107, %s108, %s109
      %p113 = pneg %p107
      %p114 = scmp.eq.s32.totalorder %s23, 1
      %p115 = por %p113, %p114
      %p116 = scmp.ne.s32.totalorder %s108, %s111
      %p117 = scmp.eq.s32.totalorder %s23, 0
      %p118 = por %p116, %p117
      %p119 = scmp.ne.s32.totalorder %s108, %s111
      %p120 = scmp.eq.s32.totalorder %s28, 1
      %p121 = por %p119, %p120
      %p122 = scmp.ne.s32.totalorder %s111, %s112
      %p123 = scmp.eq.s32.totalorder %s28, 0
      %p124 = por %p122, %p123
      %p125 = scmp.ne.s32.totalorder %s111, %s112
      %p126 = scmp.eq.s32.totalorder %s29, 1
      %p127 = por %p125, %p126
      %p129 = scmp.ne.s32.totalorder %s112, %s128
      %p130 = scmp.eq.s32.totalorder %s29, 0
      %p131 = por %p129, %p130
      %s133 = sadd.s32 %s132, 1
      %p136 = scmp.eq.s32.totalorder %s23, 1
      %p137 = scmp.ne.s32.totalorder %s132, %s134
      %p138 = scmp.eq.s32.totalorder %s23, 0
      %p139 = por %p137, %p138
      %p140 = scmp.ne.s32.totalorder %s132, %s134
      %p141 = scmp.eq.s32.totalorder %s28, 1
      %p142 = por %p140, %p141
      %p143 = scmp.ne.s32.totalorder %s134, %s135
      %p144 = scmp.eq.s32.totalorder %s28, 0
      %p145 = por %p143, %p144
      %p146 = scmp.ne.s32.totalorder %s134, %s135
      %p147 = scmp.eq.s32.totalorder %s29, 1
      %p148 = por %p146, %p147
      %p150 = scmp.ne.s32.totalorder %s135, %s149
      %p151 = scmp.eq.s32.totalorder %s29, 0
      %p152 = por %p150, %p151
      %s154 = sadd.s32 %s153, 1
      %p157 = scmp.eq.s32.totalorder %s23, 1
      %p158 = scmp.ne.s32.totalorder %s153, %s155
      %p159 = scmp.eq.s32.totalorder %s23, 0
      %p160 = por %p158, %p159
      %p161 = scmp.ne.s32.totalorder %s153, %s155
      %p162 = scmp.eq.s32.totalorder %s28, 1
      %p163 = por %p161, %p162
      %p164 = scmp.ne.s32.totalorder %s155, %s156
      %p165 = scmp.eq.s32.totalorder %s28, 0
      %p166 = por %p164, %p165
      %p167 = scmp.ne.s32.totalorder %s155, %s156
      %p168 = scmp.eq.s32.totalorder %s29, 1
      %p169 = por %p167, %p168
      %p171 = scmp.ne.s32.totalorder %s156, %s170
      %p172 = scmp.eq.s32.totalorder %s29, 0
      %p173 = por %p171, %p172
      %s175 = sadd.s32 %s174, 1
      %p178 = scmp.eq.s32.totalorder %s23, 1
      %p179 = scmp.ne.s32.totalorder %s174, %s176
      %p180 = scmp.eq.s32.totalorder %s23, 0
      %p181 = por %p179, %p180
      %p182 = scmp.ne.s32.totalorder %s174, %s176
      %p183 = scmp.eq.s32.totalorder %s28, 1
      %p184 = por %p182, %p183
      %p185 = scmp.ne.s32.totalorder %s176, %s177
      %p186 = scmp.eq.s32.totalorder %s28, 0
      %p187 = por %p185, %p186
      %p188 = scmp.ne.s32.totalorder %s176, %s177
      %p189 = scmp.eq.s32.totalorder %s29, 1
      %p190 = por %p188, %p189
      %p192 = scmp.ne.s32.totalorder %s177, %s191
      %p193 = scmp.eq.s32.totalorder %s29, 0
      %p194 = por %p192, %p193
      %s195 = ssub.s32 %s30, %s49
      %s196 = ssub.s32 %s31, %s45
      %s197 = sor.u32 %s195, %s196
      %s198 = ssub.s32 %s32, %s41
      %s199 = sor.u32 %s197, %s198
      %p200 = scmp.eq.s32.totalorder %s199, 0
      %s202 = sadd.s32 %s201, 1
      %s203 = scalar_select %p200, %s201, %s202
      %p206 = pneg %p200
      %p207 = scmp.eq.s32.totalorder %s23, 1
      %p208 = por %p206, %p207
      %p209 = scmp.ne.s32.totalorder %s201, %s204
      %p210 = scmp.eq.s32.totalorder %s23, 0
      %p211 = por %p209, %p210
      %p212 = scmp.ne.s32.totalorder %s201, %s204
      %p213 = scmp.eq.s32.totalorder %s28, 1
      %p214 = por %p212, %p213
      %p215 = scmp.ne.s32.totalorder %s204, %s205
      %p216 = scmp.eq.s32.totalorder %s28, 0
      %p217 = por %p215, %p216
      %p218 = scmp.ne.s32.totalorder %s204, %s205
      %p219 = scmp.eq.s32.totalorder %s29, 1
      %p220 = por %p218, %p219
      %p222 = scmp.ne.s32.totalorder %s205, %s221
      %p223 = scmp.eq.s32.totalorder %s29, 0
      %p224 = por %p222, %p223
      %p225 = scmp.le.s32.totalorder 1, %s23
      %p226 = scmp.lt.s32.totalorder %s23, 3
      %p227 = pnand %p225, %p226
      %p228 = pneg %p227
      // Predicated region
      $region9: #{tpu_custom_call.1} parent=5 // pred_check
        _
      $region10: #{tpu_custom_call.1} parent=5 // pred_check_branch
        %230 = sbr.rel (%p227) target = $region12
      $region11: #{tpu_custom_call.1} parent=5 // pred_region
        %s231 = ssub.s32 %s23, 1
        // Predicated region
        $region13: #{tpu_custom_call.1} parent=11 // pred_check
          %p232 = pneg %p124
        $region14: #{tpu_custom_call.1} parent=11 // pred_check_branch
          %234 = sbr.rel (%p232) target = $region16
        $region15: #{tpu_custom_call.1} parent=11 // pred_region
          %s235 = smul.u32 4, %s35
          %p236 = scmp.lt.s32.totalorder %s235, 3
          %s237 = scalar_select %p236, %s235, 3
          %s238 = smul.addr %s237, 8
          %s239 = scalar_lea.vmem %s2, %s238
          %s240 = smul.u32 4, %s35
        $region16: #{tpu_custom_call.1} parent=11 // pred_fallthru
          _
        // Predicated region
        $region17: #{tpu_custom_call.1} parent=11 // pred_check
          %p241 = pneg %p145
        $region18: #{tpu_custom_call.1} parent=11 // pred_check_branch
          %243 = sbr.rel (%p241) target = $region20
        $region19: #{tpu_custom_call.1} parent=11 // pred_region
          _
        $region20: #{tpu_custom_call.1} parent=11 // pred_fallthru
          _
        // Predicated region
        $region21: #{tpu_custom_call.1} parent=11 // pred_check
          %p244 = pneg %p166
        $region22: #{tpu_custom_call.1} parent=11 // pred_check_branch
          %246 = sbr.rel (%p244) target = $region24
        $region23: #{tpu_custom_call.1} parent=11 // pred_region
          %s248 = ssub.s32 16, 16
          %249 = vsyncadd [#allocation7], %s248
          %s251 = sshll.u32 %s4, 4
          %s252 = int_to_ptr.vmem [resolvable:$true] %s251
          %254 = dma.vmem_to_smem %s252, 16, [#allocation10], [#allocation7]
        $region24: #{tpu_custom_call.1} parent=11 // pred_fallthru
          _
        // Predicated region
        $region25: #{tpu_custom_call.1} parent=11 // pred_check
          %p255 = pneg %p187
        $region26: #{tpu_custom_call.1} parent=11 // pred_check_branch
          %257 = sbr.rel (%p255) target = $region28
        $region27: #{tpu_custom_call.1} parent=11 // pred_region
          %s259 = ssub.s32 16, 16
          %260 = vsyncadd [#allocation12], %s259
          %s262 = sshll.u32 %s5, 4
          %s263 = int_to_ptr.vmem [resolvable:$true] %s262
          %265 = dma.vmem_to_smem %s263, 16, [#allocation11], [#allocation12]
        $region28: #{tpu_custom_call.1} parent=11 // pred_fallthru
          _
      $region12: #{tpu_custom_call.1} parent=5 // pred_fallthru
        _
      %p266 = scmp.lt.s32.totalorder %s23, 2
      // Predicated region
      $region29: #{tpu_custom_call.1} parent=5 // pred_check
        %p267 = pneg %p266
      $region30: #{tpu_custom_call.1} parent=5 // pred_check_branch
        %269 = sbr.rel (%p267) target = $region32
      $region31: #{tpu_custom_call.1} parent=5 // pred_region
        // Predicated region
        $region33: #{tpu_custom_call.1} parent=31 // pred_check
          %p270 = pneg %p62
        $region34: #{tpu_custom_call.1} parent=31 // pred_check_branch
          %272 = sbr.rel (%p270) target = $region36
        $region35: #{tpu_custom_call.1} parent=31 // pred_region
          %s273 = sand.u32 %s52, 1
          %s274 = scalar_lea.sflag [#allocation5], %s273
          %s275 = sand.u32 %s52, 1
          %s276 = smul.addr %s275, 128
          %s277 = scalar_lea.vmem [#allocation4], %s276
          %s279 = ssub.s32 2048, 2048
          %280 = vsyncadd %s274, %s279
          %s281 = smul.addr %s30, 16
          %s282 = smul.addr %s281, 128
          %s283 = scalar_lea.hbm %s0, %s282
          %s284 = sshll.u32 %s277, 4
          %s285 = int_to_ptr.vmem [resolvable:$true] %s284
          %290 = dma.hbm_to_vmem [thread:$0]  %s283, 2048, %s285, %s274, 128, 128, 8
        $region36: #{tpu_custom_call.1} parent=31 // pred_fallthru
          _
        // Predicated region
        $region37: #{tpu_custom_call.1} parent=31 // pred_check
          %p291 = pneg %p92
        $region38: #{tpu_custom_call.1} parent=31 // pred_check_branch
          %293 = sbr.rel (%p291) target = $region40
        $region39: #{tpu_custom_call.1} parent=31 // pred_region
          %s294 = sand.u32 %s82, 1
          %s295 = scalar_lea.sflag [#allocation9], %s294
          %s296 = sand.u32 %s82, 1
          %s297 = smul.addr %s296, 128
          %s298 = scalar_lea.vmem [#allocation8], %s297
          %s299 = smul.u32 4, %s31
          %s300 = smul.u32 4, %s32
          %s302 = ssub.s32 2048, 2048
          %303 = vsyncadd %s295, %s302
          %s304 = smul.addr %s299, 4
          %s305 = sadd.s32 %s300, %s304
          %s306 = smul.addr %s30, 16
          %s307 = sadd.s32 %s305, %s306
          %s308 = smul.addr %s307, 128
          %s309 = scalar_lea.hbm %s1, %s308
          %s310 = sshll.u32 %s298, 4
          %s311 = int_to_ptr.vmem [resolvable:$true] %s310
          %316 = dma.hbm_to_vmem [thread:$0]  %s309, 2048, %s311, %s295, 128, 128, 8
        $region40: #{tpu_custom_call.1} parent=31 // pred_fallthru
          _
      $region32: #{tpu_custom_call.1} parent=5 // pred_fallthru
        _
      %p317 = scmp.le.s32.totalorder 1, %s23
      %p318 = scmp.lt.s32.totalorder %s23, 3
      %p319 = pnand %p317, %p318
      %p320 = pneg %p319
      // Predicated region
      $region41: #{tpu_custom_call.1} parent=5 // pred_check
        _
      $region42: #{tpu_custom_call.1} parent=5 // pred_check_branch
        %322 = sbr.rel (%p319) target = $region44
      $region43: #{tpu_custom_call.1} parent=5 // pred_region
        %s323 = ssub.s32 %s23, 1
        %s324 = sand.u32 %s55, 1
        %s325 = scalar_lea.sflag [#allocation5], %s324
        %s326 = sand.u32 %s55, 1
        %s327 = smul.addr %s326, 128
        %s328 = scalar_lea.vmem [#allocation4], %s327
        // Predicated region
        $region45: #{tpu_custom_call.1} parent=43 // pred_check
          %p329 = pneg %p68
        $region46: #{tpu_custom_call.1} parent=43 // pred_check_branch
          %331 = sbr.rel (%p329) target = $region48
        $region47: #{tpu_custom_call.1} parent=43 // pred_region
          %332 = dma.done %s325, 2048
        $region48: #{tpu_custom_call.1} parent=43 // pred_fallthru
          _
        %s333 = sand.u32 %s85, 1
        %s334 = scalar_lea.sflag [#allocation9], %s333
        %s335 = sand.u32 %s85, 1
        %s336 = smul.addr %s335, 128
        %s337 = scalar_lea.vmem [#allocation8], %s336
        // Predicated region
        $region49: #{tpu_custom_call.1} parent=43 // pred_check
          %p338 = pneg %p98
        $region50: #{tpu_custom_call.1} parent=43 // pred_check_branch
          %340 = sbr.rel (%p338) target = $region52
        $region51: #{tpu_custom_call.1} parent=43 // pred_region
          %341 = dma.done %s334, 2048
        $region52: #{tpu_custom_call.1} parent=43 // pred_fallthru
          _
        // Predicated region
        $region53: #{tpu_custom_call.1} parent=43 // pred_check
          %p342 = pneg %p166
        $region54: #{tpu_custom_call.1} parent=43 // pred_check_branch
          %344 = sbr.rel (%p342) target = $region56
        $region55: #{tpu_custom_call.1} parent=43 // pred_region
          %345 = dma.done [#allocation7], 16
        $region56: #{tpu_custom_call.1} parent=43 // pred_fallthru
          _
        // Predicated region
        $region57: #{tpu_custom_call.1} parent=43 // pred_check
          %p346 = pneg %p187
        $region58: #{tpu_custom_call.1} parent=43 // pred_check_branch
          %348 = sbr.rel (%p346) target = $region60
        $region59: #{tpu_custom_call.1} parent=43 // pred_region
          %349 = dma.done [#allocation12], 16
        $region60: #{tpu_custom_call.1} parent=43 // pred_fallthru
          _
        %350 = sfence
        %s351 = sand.u32 %s55, 1
        %s352 = scalar_lea.sflag [#allocation5], %s351
        %s353 = sand.u32 %s55, 1
        %s354 = smul.addr %s353, 128
        %s355 = scalar_lea.vmem [#allocation4], %s354
        %p356 = pneg %p68
        %p357 = pneg %p65
        %s358 = sand.u32 %s85, 1
        %s359 = scalar_lea.sflag [#allocation9], %s358
        %s360 = sand.u32 %s85, 1
        %s361 = smul.addr %s360, 128
        %s362 = scalar_lea.vmem [#allocation8], %s361
        %p363 = pneg %p98
        %p364 = pneg %p95
        %s365 = smul.u32 4, %s35
        %p366 = scmp.lt.s32.totalorder %s365, 3
        %s367 = scalar_select %p366, %s365, 3
        %s368 = smul.addr %s367, 8
        %s369 = scalar_lea.vmem %s2, %s368
        %p370 = pneg %p124
        %p371 = pneg %p121
        %p372 = pneg %p145
        %p373 = pneg %p142
        %p374 = pneg %p166
        %p375 = pneg %p163
        %p376 = pneg %p187
        %p377 = pneg %p184
        %p378 = pneg %p217
        %p379 = pneg %p214
        %s380 = sand.u32 %s204, 1
        %s381 = scalar_lea.sflag [#allocation6], %s380
        %s382 = sand.u32 %s204, 1
        %s383 = smul.addr %s382, 128
        %s384 = scalar_lea.vmem [#allocation13], %s383
        %s385 = smul.u32 4, %s34
        %s386 = smul.u32 4, %s35
        %s387 = smul.u32 4, %s35
        %p388 = scmp.lt.s32.totalorder %s387, 3
        %s389 = scalar_select %p388, %s387, 3
        %s390 = smul.addr %s389, 8
        %s391 = scalar_lea.vmem %s2, %s390
        %s392 = smul.u32 4, %s35
        %s393 = smul.u32 4, %s34
        %s394 = smul.u32 4, %s35
        %s395 = smul.u32 %s34, 4
        %p396 = scmp.eq.s32.totalorder %s35, 0
        // Predicated region
        $region61: #{tpu_custom_call.1} parent=43 // pred_check
          %p397 = pneg %p396
        $region62: #{tpu_custom_call.1} parent=43 // pred_check_branch
          %399 = sbr.rel (%p397) target = $region64
        $region63: #{tpu_custom_call.1} parent=43 // pred_region
          %v400 = vld [vmem:[%s328] sm:$0xff]
          %v401 = vld [vmem:[%s328 + $0x8] sm:$0xff]
          %s402 = scalar_lea.vmem %s328, 16 [#allocation4]
          %v403 = vld [vmem:[%s402] sm:$0xff]
          %v404 = vld [vmem:[%s402 + $0x8] sm:$0xff]
          %s405 = scalar_lea.vmem %s328, 32 [#allocation4]
          %v406 = vld [vmem:[%s405] sm:$0xff]
          %v407 = vld [vmem:[%s405 + $0x8] sm:$0xff]
          %s408 = scalar_lea.vmem %s328, 48 [#allocation4]
          %v409 = vld [vmem:[%s408] sm:$0xff]
          %v410 = vld [vmem:[%s408 + $0x8] sm:$0xff]
          %s411 = scalar_lea.vmem %s328, 64 [#allocation4]
          %v412 = vld [vmem:[%s411] sm:$0xff]
          %v413 = vld [vmem:[%s411 + $0x8] sm:$0xff]
          %s414 = scalar_lea.vmem %s328, 80 [#allocation4]
          %v415 = vld [vmem:[%s414] sm:$0xff]
          %v416 = vld [vmem:[%s414 + $0x8] sm:$0xff]
          %s417 = scalar_lea.vmem %s328, 96 [#allocation4]
          %v418 = vld [vmem:[%s417] sm:$0xff]
          %v419 = vld [vmem:[%s417 + $0x8] sm:$0xff]
          %s420 = scalar_lea.vmem %s328, 112 [#allocation4]
          %v421 = vld [vmem:[%s420] sm:$0xff]
          %v422 = vld [vmem:[%s420 + $0x8] sm:$0xff]
          %s423 = smul.u32 %s34, 32
          %s424 = sld [smem:[#allocation10 + %s423]]
          %v425 = vstv %s424
          %v426 = vmul.f32 %v425, %v400
          %v427 = vmul.f32 %v425, %v401
          %s428 = sadd.s32 %s423, 1
          %s429 = sld [smem:[#allocation10 + %s428]]
          %v430 = vstv %s429
          %v431 = vmul.f32 %v430, %v403
          %v432 = vmul.f32 %v430, %v404
          %v433 = vadd.f32 %v426, %v431
          %v434 = vadd.f32 %v427, %v432
          %s435 = sadd.s32 %s423, 2
          %s436 = sld [smem:[#allocation10 + %s435]]
          %v437 = vstv %s436
          %v438 = vmul.f32 %v437, %v406
          %v439 = vmul.f32 %v437, %v407
          %v440 = vadd.f32 %v433, %v438
          %v441 = vadd.f32 %v434, %v439
          %s442 = sadd.s32 %s423, 3
          %s443 = sld [smem:[#allocation10 + %s442]]
          %v444 = vstv %s443
          %v445 = vmul.f32 %v444, %v409
          %v446 = vmul.f32 %v444, %v410
          %v447 = vadd.f32 %v440, %v445
          %v448 = vadd.f32 %v441, %v446
          %s449 = sadd.s32 %s423, 4
          %s450 = sld [smem:[#allocation10 + %s449]]
          %v451 = vstv %s450
          %v452 = vmul.f32 %v451, %v412
          %v453 = vmul.f32 %v451, %v413
          %v454 = vadd.f32 %v447, %v452
          %v455 = vadd.f32 %v448, %v453
          %s456 = sadd.s32 %s423, 5
          %s457 = sld [smem:[#allocation10 + %s456]]
          %v458 = vstv %s457
          %v459 = vmul.f32 %v458, %v415
          %v460 = vmul.f32 %v458, %v416
          %v461 = vadd.f32 %v454, %v459
          %v462 = vadd.f32 %v455, %v460
          %s463 = sadd.s32 %s423, 6
          %s464 = sld [smem:[#allocation10 + %s463]]
          %v465 = vstv %s464
          %v466 = vmul.f32 %v465, %v418
          %v467 = vmul.f32 %v465, %v419
          %v468 = vadd.f32 %v461, %v466
          %v469 = vadd.f32 %v462, %v467
          %s470 = sadd.s32 %s423, 7
          %s471 = sld [smem:[#allocation10 + %s470]]
          %v472 = vstv %s471
          %v473 = vmul.f32 %v472, %v421
          %v474 = vmul.f32 %v472, %v422
          %v475 = vadd.f32 %v468, %v473
          %v476 = vadd.f32 %v469, %v474
          %s477 = sld [smem:[#allocation11 + %s395]]
          %v478 = vstv %s477
          %v479 = vadd.f32 %v475, %v478
          %v480 = vadd.f32 %v476, %v478
          %vm481 = vcmask 130048
          %482 = vst.msk [vmem:[#allocation2] sm:$0xff] %vm481, %v479
          %483 = vst.msk [vmem:[#allocation2 + $0x8] sm:$0xff] %vm481, %v480
          %s484 = sadd.s32 %s395, 1
          %s485 = smul.u32 %s484, 8
          %s486 = sld [smem:[#allocation10 + %s485]]
          %v487 = vstv %s486
          %v488 = vmul.f32 %v487, %v400
          %v489 = vmul.f32 %v487, %v401
          %s490 = sadd.s32 %s485, 1
          %s491 = sld [smem:[#allocation10 + %s490]]
          %v492 = vstv %s491
          %v493 = vmul.f32 %v492, %v403
          %v494 = vmul.f32 %v492, %v404
          %v495 = vadd.f32 %v488, %v493
          %v496 = vadd.f32 %v489, %v494
          %s497 = sadd.s32 %s485, 2
          %s498 = sld [smem:[#allocation10 + %s497]]
          %v499 = vstv %s498
          %v500 = vmul.f32 %v499, %v406
          %v501 = vmul.f32 %v499, %v407
          %v502 = vadd.f32 %v495, %v500
          %v503 = vadd.f32 %v496, %v501
          %s504 = sadd.s32 %s485, 3
          %s505 = sld [smem:[#allocation10 + %s504]]
          %v506 = vstv %s505
          %v507 = vmul.f32 %v506, %v409
          %v508 = vmul.f32 %v506, %v410
          %v509 = vadd.f32 %v502, %v507
          %v510 = vadd.f32 %v503, %v508
          %s511 = sadd.s32 %s485, 4
          %s512 = sld [smem:[#allocation10 + %s511]]
          %v513 = vstv %s512
          %v514 = vmul.f32 %v513, %v412
          %v515 = vmul.f32 %v513, %v413
          %v516 = vadd.f32 %v509, %v514
          %v517 = vadd.f32 %v510, %v515
          %s518 = sadd.s32 %s485, 5
          %s519 = sld [smem:[#allocation10 + %s518]]
          %v520 = vstv %s519
          %v521 = vmul.f32 %v520, %v415
          %v522 = vmul.f32 %v520, %v416
          %v523 = vadd.f32 %v516, %v521
          %v524 = vadd.f32 %v517, %v522
          %s525 = sadd.s32 %s485, 6
          %s526 = sld [smem:[#allocation10 + %s525]]
          %v527 = vstv %s526
          %v528 = vmul.f32 %v527, %v418
          %v529 = vmul.f32 %v527, %v419
          %v530 = vadd.f32 %v523, %v528
          %v531 = vadd.f32 %v524, %v529
          %s532 = sadd.s32 %s485, 7
          %s533 = sld [smem:[#allocation10 + %s532]]
          %v534 = vstv %s533
          %v535 = vmul.f32 %v534, %v421
          %v536 = vmul.f32 %v534, %v422
          %v537 = vadd.f32 %v530, %v535
          %v538 = vadd.f32 %v531, %v536
          %s539 = sld [smem:[#allocation11 + %s484]]
          %v540 = vstv %s539
          %v541 = vadd.f32 %v537, %v540
          %v542 = vadd.f32 %v538, %v540
          %543 = vst.msk [vmem:[#allocation2 + $0x10] sm:$0xff] %vm481, %v541
          %544 = vst.msk [vmem:[#allocation2 + $0x18] sm:$0xff] %vm481, %v542
          %s545 = sadd.s32 %s395, 2
          %s546 = smul.u32 %s545, 8
          %s547 = sld [smem:[#allocation10 + %s546]]
          %v548 = vstv %s547
          %v549 = vmul.f32 %v548, %v400
          %v550 = vmul.f32 %v548, %v401
          %s551 = sadd.s32 %s546, 1
          %s552 = sld [smem:[#allocation10 + %s551]]
          %v553 = vstv %s552
          %v554 = vmul.f32 %v553, %v403
          %v555 = vmul.f32 %v553, %v404
          %v556 = vadd.f32 %v549, %v554
          %v557 = vadd.f32 %v550, %v555
          %s558 = sadd.s32 %s546, 2
          %s559 = sld [smem:[#allocation10 + %s558]]
          %v560 = vstv %s559
          %v561 = vmul.f32 %v560, %v406
          %v562 = vmul.f32 %v560, %v407
          %v563 = vadd.f32 %v556, %v561
          %v564 = vadd.f32 %v557, %v562
          %s565 = sadd.s32 %s546, 3
          %s566 = sld [smem:[#allocation10 + %s565]]
          %v567 = vstv %s566
          %v568 = vmul.f32 %v567, %v409
          %v569 = vmul.f32 %v567, %v410
          %v570 = vadd.f32 %v563, %v568
          %v571 = vadd.f32 %v564, %v569
          %s572 = sadd.s32 %s546, 4
          %s573 = sld [smem:[#allocation10 + %s572]]
          %v574 = vstv %s573
          %v575 = vmul.f32 %v574, %v412
          %v576 = vmul.f32 %v574, %v413
          %v577 = vadd.f32 %v570, %v575
          %v578 = vadd.f32 %v571, %v576
          %s579 = sadd.s32 %s546, 5
          %s580 = sld [smem:[#allocation10 + %s579]]
          %v581 = vstv %s580
          %v582 = vmul.f32 %v581, %v415
          %v583 = vmul.f32 %v581, %v416
          %v584 = vadd.f32 %v577, %v582
          %v585 = vadd.f32 %v578, %v583
          %s586 = sadd.s32 %s546, 6
          %s587 = sld [smem:[#allocation10 + %s586]]
          %v588 = vstv %s587
          %v589 = vmul.f32 %v588, %v418
          %v590 = vmul.f32 %v588, %v419
          %v591 = vadd.f32 %v584, %v589
          %v592 = vadd.f32 %v585, %v590
          %s593 = sadd.s32 %s546, 7
          %s594 = sld [smem:[#allocation10 + %s593]]
          %v595 = vstv %s594
          %v596 = vmul.f32 %v595, %v421
          %v597 = vmul.f32 %v595, %v422
          %v598 = vadd.f32 %v591, %v596
          %v599 = vadd.f32 %v592, %v597
          %s600 = sld [smem:[#allocation11 + %s545]]
          %v601 = vstv %s600
          %v602 = vadd.f32 %v598, %v601
          %v603 = vadd.f32 %v599, %v601
          %604 = vst.msk [vmem:[#allocation2 + $0x20] sm:$0xff] %vm481, %v602
          %605 = vst.msk [vmem:[#allocation2 + $0x28] sm:$0xff] %vm481, %v603
          %s606 = sadd.s32 %s395, 3
          %s607 = smul.u32 %s606, 8
          %s608 = sld [smem:[#allocation10 + %s607]]
          %v609 = vstv %s608
          %v610 = vmul.f32 %v609, %v400
          %v611 = vmul.f32 %v609, %v401
          %s612 = sadd.s32 %s607, 1
          %s613 = sld [smem:[#allocation10 + %s612]]
          %v614 = vstv %s613
          %v615 = vmul.f32 %v614, %v403
          %v616 = vmul.f32 %v614, %v404
          %v617 = vadd.f32 %v610, %v615
          %v618 = vadd.f32 %v611, %v616
          %s619 = sadd.s32 %s607, 2
          %s620 = sld [smem:[#allocation10 + %s619]]
          %v621 = vstv %s620
          %v622 = vmul.f32 %v621, %v406
          %v623 = vmul.f32 %v621, %v407
          %v624 = vadd.f32 %v617, %v622
          %v625 = vadd.f32 %v618, %v623
          %s626 = sadd.s32 %s607, 3
          %s627 = sld [smem:[#allocation10 + %s626]]
          %v628 = vstv %s627
          %v629 = vmul.f32 %v628, %v409
          %v630 = vmul.f32 %v628, %v410
          %v631 = vadd.f32 %v624, %v629
          %v632 = vadd.f32 %v625, %v630
          %s633 = sadd.s32 %s607, 4
          %s634 = sld [smem:[#allocation10 + %s633]]
          %v635 = vstv %s634
          %v636 = vmul.f32 %v635, %v412
          %v637 = vmul.f32 %v635, %v413
          %v638 = vadd.f32 %v631, %v636
          %v639 = vadd.f32 %v632, %v637
          %s640 = sadd.s32 %s607, 5
          %s641 = sld [smem:[#allocation10 + %s640]]
          %v642 = vstv %s641
          %v643 = vmul.f32 %v642, %v415
          %v644 = vmul.f32 %v642, %v416
          %v645 = vadd.f32 %v638, %v643
          %v646 = vadd.f32 %v639, %v644
          %s647 = sadd.s32 %s607, 6
          %s648 = sld [smem:[#allocation10 + %s647]]
          %v649 = vstv %s648
          %v650 = vmul.f32 %v649, %v418
          %v651 = vmul.f32 %v649, %v419
          %v652 = vadd.f32 %v645, %v650
          %v653 = vadd.f32 %v646, %v651
          %s654 = sadd.s32 %s607, 7
          %s655 = sld [smem:[#allocation10 + %s654]]
          %v656 = vstv %s655
          %v657 = vmul.f32 %v656, %v421
          %v658 = vmul.f32 %v656, %v422
          %v659 = vadd.f32 %v652, %v657
          %v660 = vadd.f32 %v653, %v658
          %s661 = sld [smem:[#allocation11 + %s606]]
          %v662 = vstv %s661
          %v663 = vadd.f32 %v659, %v662
          %v664 = vadd.f32 %v660, %v662
          %665 = vst.msk [vmem:[#allocation2 + $0x30] sm:$0xff] %vm481, %v663
          %666 = vst.msk [vmem:[#allocation2 + $0x38] sm:$0xff] %vm481, %v664
          %v667 = vld [vmem:[#allocation2] sm:$0xff]
          %v668 = vld [vmem:[#allocation2 + $0x8] sm:$0xff]
          %v669 = vld [vmem:[#allocation2 + $0x10] sm:$0xff]
          %v670 = vld [vmem:[#allocation2 + $0x18] sm:$0xff]
          %v671 = vld [vmem:[#allocation2 + $0x20] sm:$0xff]
          %v672 = vld [vmem:[#allocation2 + $0x28] sm:$0xff]
          %v673 = vld [vmem:[#allocation2 + $0x30] sm:$0xff]
          %v674 = vld [vmem:[#allocation2 + $0x38] sm:$0xff]
          %v675 = vld [vmem:[%s3] sm:$0xff]
          %v676 = vld [vmem:[%s3 + $0x8] sm:$0xff]
          %v678 = vsel %vm481, %v667, 0
          %v681 = vsel %vm481, %v668, 0
          %v684 = vsel %vm481, %v669, 0
          %v687 = vsel %vm481, %v670, 0
          %v690 = vsel %vm481, %v671, 0
          %v693 = vsel %vm481, %v672, 0
          %v696 = vsel %vm481, %v673, 0
          %v699 = vsel %vm481, %v674, 0
          %701 = vmatprep.subr.mxu0 0.0
          %702 = vmatpush1.msra.mxu0 0.0
          %703 = vmatprep.subr.mxu0 0.0
          %704 = vmatpush1.msra.mxu0 0.0
          %705 = vmatprep.subr.mxu0 0.0
          %706 = vmatpush1.msra.mxu0 0.0
          %707 = vmatprep.subr.mxu0 0.0
          %708 = vmatpush1.msra.mxu0 0.0
          %709 = vmatprep.subr.mxu0 0.0
          %710 = vmatpush1.msra.mxu0 0.0
          %711 = vmatprep.subr.mxu0 0.0
          %712 = vmatpush1.msra.mxu0 0.0
          %713 = vmatprep.subr.mxu0 0.0
          %714 = vmatpush1.msra.mxu0 0.0
          %715 = vmatprep.subr.mxu0 0.0
          %716 = vmatpush1.msra.mxu0 0.0
          %717 = vmatprep.subr.mxu0 0.0
          %718 = vmatpush1.msra.mxu0 0.0
          %719 = vmatprep.subr.mxu0 0.0
          %720 = vmatpush1.msra.mxu0 0.0
          %721 = vmatprep.subr.mxu0 0.0
          %722 = vmatpush1.msra.mxu0 0.0
          %723 = vmatprep.subr.mxu0 0.0
          %724 = vmatpush1.msra.mxu0 0.0
          %725 = vmatprep.subr.mxu0 0.0
          %726 = vmatpush1.msra.mxu0 0.0
          %727 = vmatprep.subr.mxu0 0.0
          %728 = vmatpush1.msra.mxu0 0.0
          %729 = vmatprep.subr.mxu0 0.0
          %730 = vmatpush1.msra.mxu0 %v676
          %731 = vmatprep.subr.mxu0 0.0
          %732 = vmatpush1.msra.mxu0 %v675
          %733 = vmatprep.subr.mxu0 0.0
          %734 = vmatpush2.msra.mxu0 0.0
          %735 = vmatprep.subr.mxu0 0.0
          %736 = vmatpush2.msra.mxu0 0.0
          %737 = vmatprep.subr.mxu0 0.0
          %738 = vmatpush2.msra.mxu0 0.0
          %739 = vmatprep.subr.mxu0 0.0
          %740 = vmatpush2.msra.mxu0 0.0
          %741 = vmatprep.subr.mxu0 0.0
          %742 = vmatpush2.msra.mxu0 0.0
          %743 = vmatprep.subr.mxu0 0.0
          %744 = vmatpush2.msra.mxu0 0.0
          %745 = vmatprep.subr.mxu0 0.0
          %746 = vmatpush2.msra.mxu0 0.0
          %747 = vmatprep.subr.mxu0 0.0
          %748 = vmatpush2.msra.mxu0 0.0
          %749 = vmatprep.subr.mxu0 0.0
          %750 = vmatpush2.msra.mxu0 0.0
          %751 = vmatprep.subr.mxu0 0.0
          %752 = vmatpush2.msra.mxu0 0.0
          %753 = vmatprep.subr.mxu0 0.0
          %754 = vmatpush2.msra.mxu0 0.0
          %755 = vmatprep.subr.mxu0 0.0
          %756 = vmatpush2.msra.mxu0 0.0
          %757 = vmatprep.subr.mxu0 0.0
          %758 = vmatpush2.msra.mxu0 0.0
          %759 = vmatprep.subr.mxu0 0.0
          %760 = vmatpush2.msra.mxu0 0.0
          %761 = vmatprep.subr.mxu0 0.0
          %762 = vmatpush2.msra.mxu0 0.0
          %763 = vmatprep.subr.mxu0 0.0
          %764 = vmatpush2.msra.mxu0 0.0
          %765 = vmatprep.mubr.f32.mxu0 0.0
          %766 = vmatmul.mubr.f32.gmra.mxu0 %v678
          %v767 = vpop.f32.mrf.mxu0
          %v768 = vadd.f32 0.0, %v767
          %v769 = vpop.f32.mrf.mxu0
          %770 = vmatprep.mubr.f32.mxu0 0.0
          %771 = vmatmul.mubr.f32.gmra.mxu0 %v681
          %v772 = vpop.f32.mrf.mxu0
          %v773 = vadd.f32 0.0, %v772
          %v774 = vpop.f32.mrf.mxu0
          %775 = vmatprep.mubr.f32.mxu0 0.0
          %776 = vmatmul.mubr.f32.gmra.mxu0 %v684
          %v777 = vpop.f32.mrf.mxu0
          %v778 = vadd.f32 0.0, %v777
          %v779 = vpop.f32.mrf.mxu0
          %780 = vmatprep.mubr.f32.mxu0 0.0
          %781 = vmatmul.mubr.f32.gmra.mxu0 %v687
          %v782 = vpop.f32.mrf.mxu0
          %v783 = vadd.f32 0.0, %v782
          %v784 = vpop.f32.mrf.mxu0
          %785 = vmatprep.mubr.f32.mxu0 0.0
          %786 = vmatmul.mubr.f32.gmra.mxu0 %v690
          %v787 = vpop.f32.mrf.mxu0
          %v788 = vadd.f32 0.0, %v787
          %v789 = vpop.f32.mrf.mxu0
          %790 = vmatprep.mubr.f32.mxu0 0.0
          %791 = vmatmul.mubr.f32.gmra.mxu0 %v693
          %v792 = vpop.f32.mrf.mxu0
          %v793 = vadd.f32 0.0, %v792
          %v794 = vpop.f32.mrf.mxu0
          %795 = vmatprep.mubr.f32.mxu0 0.0
          %796 = vmatmul.mubr.f32.gmra.mxu0 %v696
          %v797 = vpop.f32.mrf.mxu0
          %v798 = vadd.f32 0.0, %v797
          %v799 = vpop.f32.mrf.mxu0
          %800 = vmatprep.mubr.f32.mxu0 0.0
          %801 = vmatmul.mubr.f32.gmra.mxu0 %v699
          %v802 = vpop.f32.mrf.mxu0
          %v803 = vadd.f32 0.0, %v802
          %v804 = vpop.f32.mrf.mxu0
          %805 = vdwg.mxu0
          %vm806 = vcmask 261120
          %807 = vst.msk [vmem:[#allocation3] sm:$0xff] %vm806, %v768
          %808 = vst.msk [vmem:[#allocation3 + $0x8] sm:$0xff] %vm806, %v773
          %809 = vst.msk [vmem:[#allocation3 + $0x10] sm:$0xff] %vm806, %v778
          %810 = vst.msk [vmem:[#allocation3 + $0x18] sm:$0xff] %vm806, %v783
          %811 = vst.msk [vmem:[#allocation3 + $0x20] sm:$0xff] %vm806, %v788
          %812 = vst.msk [vmem:[#allocation3 + $0x28] sm:$0xff] %vm806, %v793
          %813 = vst.msk [vmem:[#allocation3 + $0x30] sm:$0xff] %vm806, %v798
          %814 = vst.msk [vmem:[#allocation3 + $0x38] sm:$0xff] %vm806, %v803
        $region64: #{tpu_custom_call.1} parent=43 // pred_fallthru
          _
        %v815 = vld [vmem:[%s391] sm:$0xff]
        %v816 = vld [vmem:[%s391 + $0x8] sm:$0xff]
        %v817 = vld [vmem:[%s391 + $0x10] sm:$0xff]
        %v818 = vld [vmem:[%s391 + $0x18] sm:$0xff]
        %v819 = vld [vmem:[#allocation3] sm:$0xff]
        %v820 = vld [vmem:[#allocation3 + $0x8] sm:$0xff]
        %v821 = vld [vmem:[%s337] sm:$0xff]
        %v822 = vld [vmem:[%s337 + $0x8] sm:$0xff]
        %v823 = vld [vmem:[%s337 + $0x10] sm:$0xff]
        %v824 = vld [vmem:[%s337 + $0x18] sm:$0xff]
        %vm825 = vcmask 130048
        %v827 = vsel %vm825, %v815, 0
        %v830 = vsel %vm825, %v816, 0
        %v833 = vsel %vm825, %v817, 0
        %v836 = vsel %vm825, %v818, 0
        %838 = vmatprep.subr.mxu0 0.0
        %839 = vmatpush1.msra.mxu0 0.0
        %840 = vmatprep.subr.mxu0 0.0
        %841 = vmatpush1.msra.mxu0 0.0
        %842 = vmatprep.subr.mxu0 0.0
        %843 = vmatpush1.msra.mxu0 0.0
        %844 = vmatprep.subr.mxu0 0.0
        %845 = vmatpush1.msra.mxu0 0.0
        %846 = vmatprep.subr.mxu0 0.0
        %847 = vmatpush1.msra.mxu0 0.0
        %848 = vmatprep.subr.mxu0 0.0
        %849 = vmatpush1.msra.mxu0 0.0
        %850 = vmatprep.subr.mxu0 0.0
        %851 = vmatpush1.msra.mxu0 0.0
        %852 = vmatprep.subr.mxu0 0.0
        %853 = vmatpush1.msra.mxu0 0.0
        %854 = vmatprep.subr.mxu0 0.0
        %855 = vmatpush1.msra.mxu0 0.0
        %856 = vmatprep.subr.mxu0 0.0
        %857 = vmatpush1.msra.mxu0 0.0
        %858 = vmatprep.subr.mxu0 0.0
        %859 = vmatpush1.msra.mxu0 0.0
        %860 = vmatprep.subr.mxu0 0.0
        %861 = vmatpush1.msra.mxu0 0.0
        %862 = vmatprep.subr.mxu0 0.0
        %863 = vmatpush1.msra.mxu0 0.0
        %864 = vmatprep.subr.mxu0 0.0
        %865 = vmatpush1.msra.mxu0 0.0
        %866 = vmatprep.subr.mxu0 0.0
        %867 = vmatpush1.msra.mxu0 %v820
        %868 = vmatprep.subr.mxu0 0.0
        %869 = vmatpush1.msra.mxu0 %v819
        %870 = vmatprep.subr.mxu0 0.0
        %871 = vmatpush2.msra.mxu0 0.0
        %872 = vmatprep.subr.mxu0 0.0
        %873 = vmatpush2.msra.mxu0 0.0
        %874 = vmatprep.subr.mxu0 0.0
        %875 = vmatpush2.msra.mxu0 0.0
        %876 = vmatprep.subr.mxu0 0.0
        %877 = vmatpush2.msra.mxu0 0.0
        %878 = vmatprep.subr.mxu0 0.0
        %879 = vmatpush2.msra.mxu0 0.0
        %880 = vmatprep.subr.mxu0 0.0
        %881 = vmatpush2.msra.mxu0 0.0
        %882 = vmatprep.subr.mxu0 0.0
        %883 = vmatpush2.msra.mxu0 0.0
        %884 = vmatprep.subr.mxu0 0.0
        %885 = vmatpush2.msra.mxu0 0.0
        %886 = vmatprep.subr.mxu0 0.0
        %887 = vmatpush2.msra.mxu0 0.0
        %888 = vmatprep.subr.mxu0 0.0
        %889 = vmatpush2.msra.mxu0 0.0
        %890 = vmatprep.subr.mxu0 0.0
        %891 = vmatpush2.msra.mxu0 0.0
        %892 = vmatprep.subr.mxu0 0.0
        %893 = vmatpush2.msra.mxu0 0.0
        %894 = vmatprep.subr.mxu0 0.0
        %895 = vmatpush2.msra.mxu0 0.0
        %896 = vmatprep.subr.mxu0 0.0
        %897 = vmatpush2.msra.mxu0 0.0
        %898 = vmatprep.subr.mxu0 0.0
        %899 = vmatpush2.msra.mxu0 0.0
        %900 = vmatprep.subr.mxu0 0.0
        %901 = vmatpush2.msra.mxu0 0.0
        %902 = vmatprep.mubr.f32.mxu0 0.0
        %903 = vmatmul.mubr.f32.gmra.mxu0 %v827
        %v904 = vpop.f32.mrf.mxu0
        %v905 = vadd.f32 %v821, %v904
        %v906 = vpop.f32.mrf.mxu0
        %907 = vmatprep.mubr.f32.mxu0 0.0
        %908 = vmatmul.mubr.f32.gmra.mxu0 %v830
        %v909 = vpop.f32.mrf.mxu0
        %v910 = vadd.f32 %v822, %v909
        %v911 = vpop.f32.mrf.mxu0
        %912 = vmatprep.mubr.f32.mxu0 0.0
        %913 = vmatmul.mubr.f32.gmra.mxu0 %v833
        %v914 = vpop.f32.mrf.mxu0
        %v915 = vadd.f32 %v823, %v914
        %v916 = vpop.f32.mrf.mxu0
        %917 = vmatprep.mubr.f32.mxu0 0.0
        %918 = vmatmul.mubr.f32.gmra.mxu0 %v836
        %v919 = vpop.f32.mrf.mxu0
        %v920 = vadd.f32 %v824, %v919
        %v921 = vpop.f32.mrf.mxu0
        %922 = vdwg.mxu0
        %vm923 = vcmask 261120
        %924 = vst.msk [vmem:[%s384] sm:$0xff] %vm923, %v905
        %925 = vst.msk [vmem:[%s384 + $0x8] sm:$0xff] %vm923, %v910
        %926 = vst.msk [vmem:[%s384 + $0x10] sm:$0xff] %vm923, %v915
        %927 = vst.msk [vmem:[%s384 + $0x18] sm:$0xff] %vm923, %v920
        %v928 = vld [vmem:[#allocation3 + $0x10] sm:$0xff]
        %v929 = vld [vmem:[#allocation3 + $0x18] sm:$0xff]
        %s930 = scalar_lea.vmem %s337, 32 [#allocation8]
        %v931 = vld [vmem:[%s930] sm:$0xff]
        %v932 = vld [vmem:[%s930 + $0x8] sm:$0xff]
        %v933 = vld [vmem:[%s930 + $0x10] sm:$0xff]
        %v934 = vld [vmem:[%s930 + $0x18] sm:$0xff]
        %935 = vmatprep.subr.mxu0 0.0
        %936 = vmatpush1.msra.mxu0 0.0
        %937 = vmatprep.subr.mxu0 0.0
        %938 = vmatpush1.msra.mxu0 0.0
        %939 = vmatprep.subr.mxu0 0.0
        %940 = vmatpush1.msra.mxu0 0.0
        %941 = vmatprep.subr.mxu0 0.0
        %942 = vmatpush1.msra.mxu0 0.0
        %943 = vmatprep.subr.mxu0 0.0
        %944 = vmatpush1.msra.mxu0 0.0
        %945 = vmatprep.subr.mxu0 0.0
        %946 = vmatpush1.msra.mxu0 0.0
        %947 = vmatprep.subr.mxu0 0.0
        %948 = vmatpush1.msra.mxu0 0.0
        %949 = vmatprep.subr.mxu0 0.0
        %950 = vmatpush1.msra.mxu0 0.0
        %951 = vmatprep.subr.mxu0 0.0
        %952 = vmatpush1.msra.mxu0 0.0
        %953 = vmatprep.subr.mxu0 0.0
        %954 = vmatpush1.msra.mxu0 0.0
        %955 = vmatprep.subr.mxu0 0.0
        %956 = vmatpush1.msra.mxu0 0.0
        %957 = vmatprep.subr.mxu0 0.0
        %958 = vmatpush1.msra.mxu0 0.0
        %959 = vmatprep.subr.mxu0 0.0
        %960 = vmatpush1.msra.mxu0 0.0
        %961 = vmatprep.subr.mxu0 0.0
        %962 = vmatpush1.msra.mxu0 0.0
        %963 = vmatprep.subr.mxu0 0.0
        %964 = vmatpush1.msra.mxu0 %v929
        %965 = vmatprep.subr.mxu0 0.0
        %966 = vmatpush1.msra.mxu0 %v928
        %967 = vmatprep.subr.mxu0 0.0
        %968 = vmatpush2.msra.mxu0 0.0
        %969 = vmatprep.subr.mxu0 0.0
        %970 = vmatpush2.msra.mxu0 0.0
        %971 = vmatprep.subr.mxu0 0.0
        %972 = vmatpush2.msra.mxu0 0.0
        %973 = vmatprep.subr.mxu0 0.0
        %974 = vmatpush2.msra.mxu0 0.0
        %975 = vmatprep.subr.mxu0 0.0
        %976 = vmatpush2.msra.mxu0 0.0
        %977 = vmatprep.subr.mxu0 0.0
        %978 = vmatpush2.msra.mxu0 0.0
        %979 = vmatprep.subr.mxu0 0.0
        %980 = vmatpush2.msra.mxu0 0.0
        %981 = vmatprep.subr.mxu0 0.0
        %982 = vmatpush2.msra.mxu0 0.0
        %983 = vmatprep.subr.mxu0 0.0
        %984 = vmatpush2.msra.mxu0 0.0
        %985 = vmatprep.subr.mxu0 0.0
        %986 = vmatpush2.msra.mxu0 0.0
        %987 = vmatprep.subr.mxu0 0.0
        %988 = vmatpush2.msra.mxu0 0.0
        %989 = vmatprep.subr.mxu0 0.0
        %990 = vmatpush2.msra.mxu0 0.0
        %991 = vmatprep.subr.mxu0 0.0
        %992 = vmatpush2.msra.mxu0 0.0
        %993 = vmatprep.subr.mxu0 0.0
        %994 = vmatpush2.msra.mxu0 0.0
        %995 = vmatprep.subr.mxu0 0.0
        %996 = vmatpush2.msra.mxu0 0.0
        %997 = vmatprep.subr.mxu0 0.0
        %998 = vmatpush2.msra.mxu0 0.0
        %999 = vmatprep.mubr.f32.mxu0 0.0
        %1000 = vmatmul.mubr.f32.gmra.mxu0 %v827
        %v1001 = vpop.f32.mrf.mxu0
        %v1002 = vadd.f32 %v931, %v1001
        %v1003 = vpop.f32.mrf.mxu0
        %1004 = vmatprep.mubr.f32.mxu0 0.0
        %1005 = vmatmul.mubr.f32.gmra.mxu0 %v830
        %v1006 = vpop.f32.mrf.mxu0
        %v1007 = vadd.f32 %v932, %v1006
        %v1008 = vpop.f32.mrf.mxu0
        %1009 = vmatprep.mubr.f32.mxu0 0.0
        %1010 = vmatmul.mubr.f32.gmra.mxu0 %v833
        %v1011 = vpop.f32.mrf.mxu0
        %v1012 = vadd.f32 %v933, %v1011
        %v1013 = vpop.f32.mrf.mxu0
        %1014 = vmatprep.mubr.f32.mxu0 0.0
        %1015 = vmatmul.mubr.f32.gmra.mxu0 %v836
        %v1016 = vpop.f32.mrf.mxu0
        %v1017 = vadd.f32 %v934, %v1016
        %v1018 = vpop.f32.mrf.mxu0
        %1019 = vdwg.mxu0
        %s1020 = scalar_lea.vmem %s384, 32 [#allocation13]
        %1021 = vst.msk [vmem:[%s1020] sm:$0xff] %vm923, %v1002
        %1022 = vst.msk [vmem:[%s1020 + $0x8] sm:$0xff] %vm923, %v1007
        %1023 = vst.msk [vmem:[%s1020 + $0x10] sm:$0xff] %vm923, %v1012
        %1024 = vst.msk [vmem:[%s1020 + $0x18] sm:$0xff] %vm923, %v1017
        %v1025 = vld [vmem:[#allocation3 + $0x20] sm:$0xff]
        %v1026 = vld [vmem:[#allocation3 + $0x28] sm:$0xff]
        %s1027 = scalar_lea.vmem %s337, 64 [#allocation8]
        %v1028 = vld [vmem:[%s1027] sm:$0xff]
        %v1029 = vld [vmem:[%s1027 + $0x8] sm:$0xff]
        %v1030 = vld [vmem:[%s1027 + $0x10] sm:$0xff]
        %v1031 = vld [vmem:[%s1027 + $0x18] sm:$0xff]
        %1032 = vmatprep.subr.mxu0 0.0
        %1033 = vmatpush1.msra.mxu0 0.0
        %1034 = vmatprep.subr.mxu0 0.0
        %1035 = vmatpush1.msra.mxu0 0.0
        %1036 = vmatprep.subr.mxu0 0.0
        %1037 = vmatpush1.msra.mxu0 0.0
        %1038 = vmatprep.subr.mxu0 0.0
        %1039 = vmatpush1.msra.mxu0 0.0
        %1040 = vmatprep.subr.mxu0 0.0
        %1041 = vmatpush1.msra.mxu0 0.0
        %1042 = vmatprep.subr.mxu0 0.0
        %1043 = vmatpush1.msra.mxu0 0.0
        %1044 = vmatprep.subr.mxu0 0.0
        %1045 = vmatpush1.msra.mxu0 0.0
        %1046 = vmatprep.subr.mxu0 0.0
        %1047 = vmatpush1.msra.mxu0 0.0
        %1048 = vmatprep.subr.mxu0 0.0
        %1049 = vmatpush1.msra.mxu0 0.0
        %1050 = vmatprep.subr.mxu0 0.0
        %1051 = vmatpush1.msra.mxu0 0.0
        %1052 = vmatprep.subr.mxu0 0.0
        %1053 = vmatpush1.msra.mxu0 0.0
        %1054 = vmatprep.subr.mxu0 0.0
        %1055 = vmatpush1.msra.mxu0 0.0
        %1056 = vmatprep.subr.mxu0 0.0
        %1057 = vmatpush1.msra.mxu0 0.0
        %1058 = vmatprep.subr.mxu0 0.0
        %1059 = vmatpush1.msra.mxu0 0.0
        %1060 = vmatprep.subr.mxu0 0.0
        %1061 = vmatpush1.msra.mxu0 %v1026
        %1062 = vmatprep.subr.mxu0 0.0
        %1063 = vmatpush1.msra.mxu0 %v1025
        %1064 = vmatprep.subr.mxu0 0.0
        %1065 = vmatpush2.msra.mxu0 0.0
        %1066 = vmatprep.subr.mxu0 0.0
        %1067 = vmatpush2.msra.mxu0 0.0
        %1068 = vmatprep.subr.mxu0 0.0
        %1069 = vmatpush2.msra.mxu0 0.0
        %1070 = vmatprep.subr.mxu0 0.0
        %1071 = vmatpush2.msra.mxu0 0.0
        %1072 = vmatprep.subr.mxu0 0.0
        %1073 = vmatpush2.msra.mxu0 0.0
        %1074 = vmatprep.subr.mxu0 0.0
        %1075 = vmatpush2.msra.mxu0 0.0
        %1076 = vmatprep.subr.mxu0 0.0
        %1077 = vmatpush2.msra.mxu0 0.0
        %1078 = vmatprep.subr.mxu0 0.0
        %1079 = vmatpush2.msra.mxu0 0.0
        %1080 = vmatprep.subr.mxu0 0.0
        %1081 = vmatpush2.msra.mxu0 0.0
        %1082 = vmatprep.subr.mxu0 0.0
        %1083 = vmatpush2.msra.mxu0 0.0
        %1084 = vmatprep.subr.mxu0 0.0
        %1085 = vmatpush2.msra.mxu0 0.0
        %1086 = vmatprep.subr.mxu0 0.0
        %1087 = vmatpush2.msra.mxu0 0.0
        %1088 = vmatprep.subr.mxu0 0.0
        %1089 = vmatpush2.msra.mxu0 0.0
        %1090 = vmatprep.subr.mxu0 0.0
        %1091 = vmatpush2.msra.mxu0 0.0
        %1092 = vmatprep.subr.mxu0 0.0
        %1093 = vmatpush2.msra.mxu0 0.0
        %1094 = vmatprep.subr.mxu0 0.0
        %1095 = vmatpush2.msra.mxu0 0.0
        %1096 = vmatprep.mubr.f32.mxu0 0.0
        %1097 = vmatmul.mubr.f32.gmra.mxu0 %v827
        %v1098 = vpop.f32.mrf.mxu0
        %v1099 = vadd.f32 %v1028, %v1098
        %v1100 = vpop.f32.mrf.mxu0
        %1101 = vmatprep.mubr.f32.mxu0 0.0
        %1102 = vmatmul.mubr.f32.gmra.mxu0 %v830
        %v1103 = vpop.f32.mrf.mxu0
        %v1104 = vadd.f32 %v1029, %v1103
        %v1105 = vpop.f32.mrf.mxu0
        %1106 = vmatprep.mubr.f32.mxu0 0.0
        %1107 = vmatmul.mubr.f32.gmra.mxu0 %v833
        %v1108 = vpop.f32.mrf.mxu0
        %v1109 = vadd.f32 %v1030, %v1108
        %v1110 = vpop.f32.mrf.mxu0
        %1111 = vmatprep.mubr.f32.mxu0 0.0
        %1112 = vmatmul.mubr.f32.gmra.mxu0 %v836
        %v1113 = vpop.f32.mrf.mxu0
        %v1114 = vadd.f32 %v1031, %v1113
        %v1115 = vpop.f32.mrf.mxu0
        %1116 = vdwg.mxu0
        %s1117 = scalar_lea.vmem %s384, 64 [#allocation13]
        %1118 = vst.msk [vmem:[%s1117] sm:$0xff] %vm923, %v1099
        %1119 = vst.msk [vmem:[%s1117 + $0x8] sm:$0xff] %vm923, %v1104
        %1120 = vst.msk [vmem:[%s1117 + $0x10] sm:$0xff] %vm923, %v1109
        %1121 = vst.msk [vmem:[%s1117 + $0x18] sm:$0xff] %vm923, %v1114
        %v1122 = vld [vmem:[#allocation3 + $0x30] sm:$0xff]
        %v1123 = vld [vmem:[#allocation3 + $0x38] sm:$0xff]
        %s1124 = scalar_lea.vmem %s337, 96 [#allocation8]
        %v1125 = vld [vmem:[%s1124] sm:$0xff]
        %v1126 = vld [vmem:[%s1124 + $0x8] sm:$0xff]
        %v1127 = vld [vmem:[%s1124 + $0x10] sm:$0xff]
        %v1128 = vld [vmem:[%s1124 + $0x18] sm:$0xff]
        %1129 = vmatprep.subr.mxu0 0.0
        %1130 = vmatpush1.msra.mxu0 0.0
        %1131 = vmatprep.subr.mxu0 0.0
        %1132 = vmatpush1.msra.mxu0 0.0
        %1133 = vmatprep.subr.mxu0 0.0
        %1134 = vmatpush1.msra.mxu0 0.0
        %1135 = vmatprep.subr.mxu0 0.0
        %1136 = vmatpush1.msra.mxu0 0.0
        %1137 = vmatprep.subr.mxu0 0.0
        %1138 = vmatpush1.msra.mxu0 0.0
        %1139 = vmatprep.subr.mxu0 0.0
        %1140 = vmatpush1.msra.mxu0 0.0
        %1141 = vmatprep.subr.mxu0 0.0
        %1142 = vmatpush1.msra.mxu0 0.0
        %1143 = vmatprep.subr.mxu0 0.0
        %1144 = vmatpush1.msra.mxu0 0.0
        %1145 = vmatprep.subr.mxu0 0.0
        %1146 = vmatpush1.msra.mxu0 0.0
        %1147 = vmatprep.subr.mxu0 0.0
        %1148 = vmatpush1.msra.mxu0 0.0
        %1149 = vmatprep.subr.mxu0 0.0
        %1150 = vmatpush1.msra.mxu0 0.0
        %1151 = vmatprep.subr.mxu0 0.0
        %1152 = vmatpush1.msra.mxu0 0.0
        %1153 = vmatprep.subr.mxu0 0.0
        %1154 = vmatpush1.msra.mxu0 0.0
        %1155 = vmatprep.subr.mxu0 0.0
        %1156 = vmatpush1.msra.mxu0 0.0
        %1157 = vmatprep.subr.mxu0 0.0
        %1158 = vmatpush1.msra.mxu0 %v1123
        %1159 = vmatprep.subr.mxu0 0.0
        %1160 = vmatpush1.msra.mxu0 %v1122
        %1161 = vmatprep.subr.mxu0 0.0
        %1162 = vmatpush2.msra.mxu0 0.0
        %1163 = vmatprep.subr.mxu0 0.0
        %1164 = vmatpush2.msra.mxu0 0.0
        %1165 = vmatprep.subr.mxu0 0.0
        %1166 = vmatpush2.msra.mxu0 0.0
        %1167 = vmatprep.subr.mxu0 0.0
        %1168 = vmatpush2.msra.mxu0 0.0
        %1169 = vmatprep.subr.mxu0 0.0
        %1170 = vmatpush2.msra.mxu0 0.0
        %1171 = vmatprep.subr.mxu0 0.0
        %1172 = vmatpush2.msra.mxu0 0.0
        %1173 = vmatprep.subr.mxu0 0.0
        %1174 = vmatpush2.msra.mxu0 0.0
        %1175 = vmatprep.subr.mxu0 0.0
        %1176 = vmatpush2.msra.mxu0 0.0
        %1177 = vmatprep.subr.mxu0 0.0
        %1178 = vmatpush2.msra.mxu0 0.0
        %1179 = vmatprep.subr.mxu0 0.0
        %1180 = vmatpush2.msra.mxu0 0.0
        %1181 = vmatprep.subr.mxu0 0.0
        %1182 = vmatpush2.msra.mxu0 0.0
        %1183 = vmatprep.subr.mxu0 0.0
        %1184 = vmatpush2.msra.mxu0 0.0
        %1185 = vmatprep.subr.mxu0 0.0
        %1186 = vmatpush2.msra.mxu0 0.0
        %1187 = vmatprep.subr.mxu0 0.0
        %1188 = vmatpush2.msra.mxu0 0.0
        %1189 = vmatprep.subr.mxu0 0.0
        %1190 = vmatpush2.msra.mxu0 0.0
        %1191 = vmatprep.subr.mxu0 0.0
        %1192 = vmatpush2.msra.mxu0 0.0
        %1193 = vmatprep.mubr.f32.mxu0 0.0
        %1194 = vmatmul.mubr.f32.gmra.mxu0 %v827
        %v1195 = vpop.f32.mrf.mxu0
        %v1196 = vadd.f32 %v1125, %v1195
        %v1197 = vpop.f32.mrf.mxu0
        %1198 = vmatprep.mubr.f32.mxu0 0.0
        %1199 = vmatmul.mubr.f32.gmra.mxu0 %v830
        %v1200 = vpop.f32.mrf.mxu0
        %v1201 = vadd.f32 %v1126, %v1200
        %v1202 = vpop.f32.mrf.mxu0
        %1203 = vmatprep.mubr.f32.mxu0 0.0
        %1204 = vmatmul.mubr.f32.gmra.mxu0 %v833
        %v1205 = vpop.f32.mrf.mxu0
        %v1206 = vadd.f32 %v1127, %v1205
        %v1207 = vpop.f32.mrf.mxu0
        %1208 = vmatprep.mubr.f32.mxu0 0.0
        %1209 = vmatmul.mubr.f32.gmra.mxu0 %v836
        %v1210 = vpop.f32.mrf.mxu0
        %v1211 = vadd.f32 %v1128, %v1210
        %v1212 = vpop.f32.mrf.mxu0
        %1213 = vdwg.mxu0
        %s1214 = scalar_lea.vmem %s384, 96 [#allocation13]
        %1215 = vst.msk [vmem:[%s1214] sm:$0xff] %vm923, %v1196
        %1216 = vst.msk [vmem:[%s1214 + $0x8] sm:$0xff] %vm923, %v1201
        %1217 = vst.msk [vmem:[%s1214 + $0x10] sm:$0xff] %vm923, %v1206
        %1218 = vst.msk [vmem:[%s1214 + $0x18] sm:$0xff] %vm923, %v1211
        %s1219 = sand.u32 %s204, 1
        %s1220 = scalar_lea.sflag [#allocation6], %s1219
        %s1221 = sand.u32 %s204, 1
        %s1222 = smul.addr %s1221, 128
        %s1223 = scalar_lea.vmem [#allocation13], %s1222
        // Predicated region
        $region65: #{tpu_custom_call.1} parent=43 // pred_check
          %p1224 = pneg %p214
        $region66: #{tpu_custom_call.1} parent=43 // pred_check_branch
          %1226 = sbr.rel (%p1224) target = $region68
        $region67: #{tpu_custom_call.1} parent=43 // pred_region
          %s1227 = smul.u32 4, %s34
          %s1228 = smul.u32 4, %s35
          %s1230 = ssub.s32 2048, 2048
          %1231 = vsyncadd %s1220, %s1230
          %s1232 = smul.addr %s1227, 4
          %s1233 = sadd.s32 %s1228, %s1232
          %s1234 = smul.addr %s33, 16
          %s1235 = sadd.s32 %s1233, %s1234
          %s1236 = smul.addr %s1235, 128
          %s1237 = scalar_lea.hbm %s6, %s1236
          %s1238 = sshll.u32 %s1223, 4
          %s1239 = int_to_ptr.vmem [resolvable:$true] %s1238
          %1244 = dma.vmem_to_hbm [thread:$0]  %s1239, 2048, %s1237, %s1220, 128, 128, 8
        $region68: #{tpu_custom_call.1} parent=43 // pred_fallthru
          _
      $region44: #{tpu_custom_call.1} parent=5 // pred_fallthru
        _
      %p1245 = scmp.le.s32.totalorder 2, %s23
      // Predicated region
      $region69: #{tpu_custom_call.1} parent=5 // pred_check
        %p1246 = pneg %p1245
      $region70: #{tpu_custom_call.1} parent=5 // pred_check_branch
        %1248 = sbr.rel (%p1246) target = $region72
      $region71: #{tpu_custom_call.1} parent=5 // pred_region
        %s1249 = ssub.s32 %s23, 2
        // Predicated region
        $region73: #{tpu_custom_call.1} parent=71 // pred_check
          %p1250 = pneg %p220
        $region74: #{tpu_custom_call.1} parent=71 // pred_check_branch
          %1252 = sbr.rel (%p1250) target = $region76
        $region75: #{tpu_custom_call.1} parent=71 // pred_region
          %s1253 = sand.u32 %s205, 1
          %s1254 = scalar_lea.sflag [#allocation6], %s1253
          %s1255 = sand.u32 %s205, 1
          %s1256 = smul.addr %s1255, 128
          %s1257 = scalar_lea.vmem [#allocation13], %s1256
          %1258 = dma.done %s1254, 2048
        $region76: #{tpu_custom_call.1} parent=71 // pred_fallthru
          _
      $region72: #{tpu_custom_call.1} parent=5 // pred_fallthru
        _
    $region6: #{tpu_custom_call.1} parent=1 // loop_footer
      %s27 = sadd.s32 1, %s23
    $region7: #{tpu_custom_call.1} parent=1 // loop_footer_branch
      %22 = sbr.rel target = $region3
    $region8: #{tpu_custom_call.1} parent=1 // loop_exit
      _
    %1259 = vsyncpa [#allocation5], 1
    %s1260 = scalar_lea.sflag [#allocation5], 1
    %1261 = vsyncpa %s1260, 1
    %1262 = vsyncpa [#allocation9], 1
    %s1263 = scalar_lea.sflag [#allocation9], 1
    %1264 = vsyncpa %s1263, 1
    %1265 = vsyncpa [#allocation6], 1
    %s1266 = scalar_lea.sflag [#allocation6], 1
    %1267 = vsyncpa %s1266, 1
    %1268 = vsyncpa [#allocation7], 1
    %s1269 = scalar_lea.sflag [#allocation7], 1
    %1270 = vsyncpa %s1269, 1
    %1271 = vsyncpa [#allocation12], 1

</llo_original>
